<compile_context>
chip_gen: v7x
topology: tpu7x:2x2x1
jax: 0.10.0
libtpu: 0.0.40
codegen_flags: <defaults>
</compile_context>

<pallas_src>
import functools
import numpy as np
import jax
import jax.numpy as jnp
from jax.experimental import pallas as pl
from jax.experimental.pallas import tpu as pltpu  # noqa: F401  (TPU backend)

# ----------------------------- model sizes -----------------------------------
G_NUM, U_NUM, V_NUM, A_NUM = 3, 4, 5, 3          # group / user / item / attribute counts
EMB_SIZE = 32
HIDDEN = 100                                     # forced by scorer2 = Linear(1, 100)
HPAD = 128                                       # lane-padded hidden size
ENTITY = G_NUM + U_NUM + V_NUM + A_NUM + 1       # 16 (incl. padding node)
PADDING_ID = ENTITY - 1
NUM_PERS = 4
SP = 8                                           # padded per-sample node count
LP = 8                                           # padded interest sequence length
BPAD = 8                                         # sublane padding for batch-sized rows

RELS = [
    ("user", "member_of", "group"),
    ("group", "group_interact", "item"),
    ("group", "group_like", "attribute"),
    ("user", "interact", "item"),
    ("user", "friends", "user"),
    ("user", "like", "attribute"),
    ("attribute", "belong_to", "item"),
]
NREL = len(RELS)
TYPE_SIZES = {"group": G_NUM, "user": U_NUM, "item": V_NUM, "attribute": A_NUM}
TYPE_OFFSETS = {
    "group": (0, G_NUM),
    "user": (G_NUM, G_NUM + U_NUM),
    "item": (G_NUM + U_NUM, G_NUM + U_NUM + V_NUM),
    "attribute": (G_NUM + U_NUM + V_NUM, G_NUM + U_NUM + V_NUM + A_NUM),
}

# Set to jnp.bfloat16 on v6e/v7x for native-rate MXU operands (accumulation stays f32
# via preferred_element_type).  Default f32 matches the PyTorch reference numerics.
MATMUL_DTYPE = jnp.float32


def _dot(a, b):
    if MATMUL_DTYPE != jnp.float32:
        a = a.astype(MATMUL_DTYPE)
        b = b.astype(MATMUL_DTYPE)
    return jnp.dot(a, b, preferred_element_type=jnp.float32)


# ----------------------------- the fused kernel --------------------------------

def graph_encoder_kernel(
        emb_bd_ref,    # (NREL*ENTITY, NREL*EMB)  block-diagonal embedding
        w_rel_ref,     # (NREL*EMB, HPAD)         K-stacked relation weights
        adj_rel_ref,   # (ENTITY, NREL*ENTITY)    lane-concat adjacencies * inv_cnt
        bias_rel_ref,  # (ENTITY, HPAD)           sum_r mask_r*b_r * inv_cnt
        sx_ref,        # (B*SP, EMB)              per-sample GCN inputs (flattened)
        sadj_ref,      # (B*SP, B*SP)             block-diagonal per-sample adjacency
        gcn_w_ref,     # (EMB, HPAD)
        gcn_b_ref,     # (1, HPAD)
        sel_gnn_ref,   # (B*LP, ENTITY)           user one-hots + eps*cur_node one-hots
        sel_samp_ref,  # (B*LP, B*SP)             (1-eps)*per-sample GCN row selection
        sel_rej_ref,   # (BPAD, ENTITY)           rejection averaging matrix
        mm_place_ref,  # (B*LP, BPAD)             one-hot placement of the fc_neg row
        fc_w_ref,      # (HPAD, HPAD)
        fc_b_ref,      # (1, HPAD)
        w1x_ref,       # (HPAD, 2*P)  cols 0..P-1: init scorer1, cols P..2P-1: refine
        w1b_ref,       # (HPAD, P)    refinement anchor scorer1
        b1i_ref,       # (P, 1, 1)
        w2i_ref,       # (P, 1, HPAD)
        b2i_ref,       # (P, 1, HPAD)
        b1r_ref,       # (P, 1, 1)
        w2r_ref,       # (P, 1, HPAD)
        b2r_ref,       # (P, 1, HPAD)
        ctx_ref,       # out: (P*B, HPAD)
        *, batch, seq_len, num_heads):
    # ---- HeteroGraphConv: all 7 relations in two batched matmuls -------------------
    support = _dot(emb_bd_ref[...], w_rel_ref[...])                # (NREL*E, HPAD)
    h1 = _dot(adj_rel_ref[...], support) + bias_rel_ref[...]       # (E, HPAD), mean done
    gnn = jnp.where(h1 >= 0.0, h1, 0.2 * h1)                       # LeakyReLU(0.2)

    # ---- per-sample GraphConvolution (layers=1), batched block-diagonally ----------
    sup = _dot(sx_ref[...], gcn_w_ref[...])                        # (B*SP, HPAD)
    samp = _dot(sadj_ref[...], sup) + gcn_b_ref[...]               # (B*SP, HPAD)

    # ---- rejection feedback + interest sequence assembly (selection matmuls) -------
    rej = _dot(sel_rej_ref[...], gnn)                              # (BPAD, HPAD)
    mm = jnp.maximum(_dot(rej, fc_w_ref[...]) + fc_b_ref[...], 0.0)
    x_flat = (_dot(sel_gnn_ref[...], gnn)
              + _dot(sel_samp_ref[...], samp)
              + _dot(mm_place_ref[...], mm))                       # (B*LP, HPAD)
    H = x_flat.shape[-1]
    x = x_flat.reshape(batch, seq_len, H)                          # (B, LP, HPAD)

    # ---- multi-head self-attention: init phase + one refinement round --------------
    proj = _dot(x_flat, w1x_ref[...])                              # (B*LP, 2*heads)
    ctx0_list, sm_list = [], []
    for h in range(num_heads):                                     # static unroll
        lin = proj[:, h:h + 1].reshape(batch, seq_len, 1)
        s1 = jax.nn.sigmoid(lin + b1i_ref[h])
        scores = s1 * w2i_ref[h] + b2i_ref[h]                      # (B, LP, HPAD)
        # F.softmax with no dim on a 3-D tensor -> legacy dim=0 (batch axis)
        m = jnp.max(scores, axis=0, keepdims=True)
        e = jnp.exp(scores - m)
        sm = e * pl.reciprocal(jnp.sum(e, axis=0, keepdims=True), approx=True)
        ctx0_list.append(jnp.sum(sm * x, axis=1))                  # (B, HPAD)
        sm_list.append(sm)
    ctx0_all = jnp.concatenate(ctx0_list, axis=0)                  # (heads*B, HPAD)
    lin_a_all = _dot(ctx0_all, w1b_ref[...])                       # (heads*B, heads)

    out_list = []
    for h in range(num_heads):                                     # static unroll
        lin_x = proj[:, num_heads + h:num_heads + h + 1].reshape(batch, seq_len, 1)
        lin_a = lin_a_all[h * batch:(h + 1) * batch, h:h + 1].reshape(batch, 1, 1)
        s1r = jax.nn.sigmoid(lin_x + lin_a + b1r_ref[h])
        scores_r = s1r * w2r_ref[h] + b2r_ref[h] + sm_list[h]
        mr = jnp.max(scores_r, axis=0, keepdims=True)
        er = jnp.exp(scores_r - mr)
        smr = er * pl.reciprocal(jnp.sum(er, axis=0, keepdims=True), approx=True)
        out_list.append(jnp.sum(smr * x, axis=1))                  # (B, HPAD)
    ctx_ref[...] = jnp.concatenate(out_list, axis=0)               # one dense (8,128) store


# ----------------------------- parameter / graph setup ------------------------

def _norm_both(adj):
    dd = jnp.maximum(adj.sum(axis=1), 1.0)
    ds = jnp.maximum(adj.sum(axis=0), 1.0)
    return adj / jnp.sqrt(dd)[:, None] / jnp.sqrt(ds)[None, :]


def _sym_norm(adj):
    d = jnp.maximum(adj.sum(axis=1), 1.0)
    return adj / jnp.sqrt(d)[:, None] / jnp.sqrt(d)[None, :]


def build_params_and_graph(seed=0):
    keys = iter(jax.random.split(jax.random.PRNGKey(seed), 128))

    def uni(shape, stdv):
        return jax.random.uniform(next(keys), shape, jnp.float32, -stdv, stdv)

    params = {}
    emb = jax.random.normal(next(keys), (ENTITY, EMB_SIZE), jnp.float32)
    params["embedding"] = emb.at[PADDING_ID].set(0.0)     # padding_idx row zeroed
    params["eps"] = jnp.float32(0.0)

    params["conv1"] = {}
    graph_adj = {}
    for (src, rel, dst) in RELS:
        nd, ns = TYPE_SIZES[dst], TYPE_SIZES[src]
        a = (jax.random.uniform(next(keys), (nd, ns)) < 0.6).astype(jnp.float32)
        graph_adj[rel] = _norm_both(a)
        w = uni((EMB_SIZE, HIDDEN), 1.0 / (EMB_SIZE ** 0.5))
        b = uni((1, HIDDEN), 1.0 / (HIDDEN ** 0.5))
        params["conv1"][rel] = (w, b)

    stdv = 1.0 / (HIDDEN ** 0.5)
    params["gcn_w"] = uni((EMB_SIZE, HIDDEN), stdv)
    params["gcn_b"] = uni((1, HIDDEN), stdv)
    params["fc_neg_w"] = uni((HIDDEN, HIDDEN), stdv)
    params["fc_neg_b"] = uni((1, HIDDEN), stdv)

    params["attn_init"] = []
    for _ in range(NUM_PERS):
        s = 1.0 / (HIDDEN ** 0.5)
        params["attn_init"].append(
            (uni((HIDDEN, 1), s), uni((1, 1), s), uni((1, 100), s), uni((1, 100), s)))
    params["attn_ref"] = []
    for _ in range(NUM_PERS):
        s = 1.0 / ((2 * HIDDEN) ** 0.5)
        w1 = uni((2 * HIDDEN, 1), s)
        params["attn_ref"].append(
            (w1[:HIDDEN], w1[HIDDEN:], uni((1, 1), s), uni((1, 100), s), uni((1, 100), s)))

    return params, {"adj": graph_adj}


def build_b_state(seed=1):
    keys = iter(jax.random.split(jax.random.PRNGKey(seed), 8))

    def sample_adj(n):
        a = (jax.random.uniform(next(keys), (n, n)) < 0.5).astype(jnp.float32)
        a = jnp.minimum(a + a.T + jnp.eye(n, dtype=jnp.float32), 1.0)
        return _sym_norm(a)

    s0 = {
        "neighbors": jnp.array([3, 7, 8, 12, 0, 13], dtype=jnp.int32),
        "adj": sample_adj(6),
        "cur_node": jnp.array([3, 7, 8, 12], dtype=jnp.int32),
        "rej_feature": [13, 14],
        "rej_item": [],
        "user": jnp.array([3], dtype=jnp.int32),
    }
    s1 = {
        "neighbors": jnp.array([4, 9, 14, 6, 10], dtype=jnp.int32),
        "adj": sample_adj(5),
        "cur_node": jnp.array([4, 9, 14], dtype=jnp.int32),
        "rej_feature": [],
        "rej_item": [8, 9],
        "user": jnp.array([4], dtype=jnp.int32),
    }
    return [s0, s1]


# ----------------------------- forward builder ---------------------------------

def build_forward(params, graph, b_state):
    B = len(b_state)
    assert B <= BPAD and NUM_PERS * B <= 8
    emb_np = np.asarray(params["embedding"], np.float32)          # (16, 32)
    eps = float(params["eps"])

    # --- relation stage packing: block-diag emb, K-stacked W, lane-concat adj -------
    emb_bd = np.zeros((NREL * ENTITY, NREL * EMB_SIZE), np.float32)
    w_rel = np.zeros((NREL * EMB_SIZE, HPAD), np.float32)
    adj_rel = np.zeros((ENTITY, NREL * ENTITY), np.float32)
    bias_rel = np.zeros((ENTITY, HPAD), np.float32)
    counts = np.zeros((ENTITY,), np.float32)
    for (src, rel, dst) in RELS:
        d_lo, d_hi = TYPE_OFFSETS[dst]
        counts[d_lo:d_hi] += 1.0
    inv_cnt = 1.0 / np.maximum(counts, 1.0)
    for r, (src, rel, dst) in enumerate(RELS):
        s_lo, s_hi = TYPE_OFFSETS[src]
        d_lo, d_hi = TYPE_OFFSETS[dst]
        a_full = np.zeros((ENTITY, ENTITY), np.float32)
        a_full[d_lo:d_hi, s_lo:s_hi] = np.asarray(graph["adj"][rel], np.float32)
        adj_rel[:, r * ENTITY:(r + 1) * ENTITY] = inv_cnt[:, None] * a_full
        w, b = params["conv1"][rel]
        w_rel[r * EMB_SIZE:(r + 1) * EMB_SIZE, :HIDDEN] = np.asarray(w, np.float32)
        bias_rel[d_lo:d_hi, :HIDDEN] += np.asarray(b, np.float32)[0]
        emb_bd[r * ENTITY:(r + 1) * ENTITY, r * EMB_SIZE:(r + 1) * EMB_SIZE] = emb_np
    bias_rel *= inv_cnt[:, None]

    # --- per-sample GCN packing: block-diagonal batch --------------------------------
    BSP = B * SP
    sx_flat = np.zeros((BSP, EMB_SIZE), np.float32)
    sadj_bd = np.zeros((BSP, BSP), np.float32)
    for b, s in enumerate(b_state):
        n = int(s["neighbors"].shape[0])
        sx_flat[b * SP:b * SP + n] = emb_np[np.asarray(s["neighbors"])]
        sadj_bd[b * SP:b * SP + n, b * SP:b * SP + n] = np.asarray(s["adj"], np.float32)
    gcn_w = np.zeros((EMB_SIZE, HPAD), np.float32)
    gcn_w[:, :HIDDEN] = np.asarray(params["gcn_w"], np.float32)
    gcn_b = np.zeros((1, HPAD), np.float32)
    gcn_b[:, :HIDDEN] = np.asarray(params["gcn_b"], np.float32)

    # --- static selection / averaging matrices (all indices known at build time) -----
    Lmax = max(int(s["cur_node"].shape[0]) for s in b_state)
    mm_pos = 1 + Lmax                                  # row where the fc_neg output lands
    assert mm_pos < LP
    BLP = B * LP
    sel_gnn = np.zeros((BLP, ENTITY), np.float32)
    sel_samp = np.zeros((BLP, BSP), np.float32)
    mm_place = np.zeros((BLP, BPAD), np.float32)
    sel_rej = np.zeros((BPAD, ENTITY), np.float32)
    for b, s in enumerate(b_state):
        sel_gnn[b * LP + 0, int(s["user"][0])] = 1.0
        cur = np.asarray(s["cur_node"])
        for j in range(cur.shape[0]):
            sel_gnn[b * LP + 1 + j, int(cur[j])] = eps
            sel_samp[b * LP + 1 + j, b * SP + j] = 1.0 - eps
        mm_place[b * LP + mm_pos, b] = 1.0
        if len(s["rej_feature"]) > 0:
            for idx in s["rej_feature"]:
                sel_rej[b, int(idx)] += 1.0 / len(s["rej_feature"])
        if len(s["rej_item"]) > 0:
            for idx in s["rej_item"]:
                sel_rej[b, int(idx)] += 1.0 / len(s["rej_item"])

    # --- fc_neg (zero-padded to 128 lanes in and out) ---------------------------------
    fc_w = np.zeros((HPAD, HPAD), np.float32)
    fc_w[:HIDDEN, :HIDDEN] = np.asarray(params["fc_neg_w"], np.float32)
    fc_b = np.zeros((1, HPAD), np.float32)
    fc_b[:, :HIDDEN] = np.asarray(params["fc_neg_b"], np.float32)

    # --- attention head parameter packing (heads batched along lanes) -----------------
    w1x = np.zeros((HPAD, 2 * NUM_PERS), np.float32)   # cols 0..3 init, 4..7 refine
    w1b_all = np.zeros((HPAD, NUM_PERS), np.float32)
    b1i = np.zeros((NUM_PERS, 1, 1), np.float32)
    w2i = np.zeros((NUM_PERS, 1, HPAD), np.float32)
    b2i = np.zeros((NUM_PERS, 1, HPAD), np.float32)
    b1r = np.zeros((NUM_PERS, 1, 1), np.float32)
    w2r = np.zeros((NUM_PERS, 1, HPAD), np.float32)
    b2r = np.zeros((NUM_PERS, 1, HPAD), np.float32)
    for h, (w1, b1, w2, b2) in enumerate(params["attn_init"]):
        w1x[:HIDDEN, h] = np.asarray(w1)[:, 0]
        b1i[h, 0, 0] = np.asarray(b1)[0, 0]
        w2i[h, 0, :HIDDEN] = np.asarray(w2)[0]
        b2i[h, 0, :HIDDEN] = np.asarray(b2)[0]
    for h, (wa, wb, b1, w2, b2) in enumerate(params["attn_ref"]):
        w1x[:HIDDEN, NUM_PERS + h] = np.asarray(wa)[:, 0]
        w1b_all[:HIDDEN, h] = np.asarray(wb)[:, 0]
        b1r[h, 0, 0] = np.asarray(b1)[0, 0]
        w2r[h, 0, :HIDDEN] = np.asarray(w2)[0]
        b2r[h, 0, :HIDDEN] = np.asarray(b2)[0]

    ops = tuple(jnp.asarray(a) for a in (
        emb_bd, w_rel, adj_rel, bias_rel,
        sx_flat, sadj_bd, gcn_w, gcn_b,
        sel_gnn, sel_samp, sel_rej, mm_place,
        fc_w, fc_b,
        w1x, w1b_all, b1i, w2i, b2i, b1r, w2r, b2r))

    # One fused pallas_call; no grid / BlockSpecs (whole working set <0.5 MiB in VMEM).
    fused = pl.pallas_call(
        functools.partial(graph_encoder_kernel,
                          batch=B, seq_len=LP, num_heads=NUM_PERS),
        out_shape=jax.ShapeDtypeStruct((NUM_PERS * B, HPAD), jnp.float32),
    )
    forward = jax.jit(lambda *args: fused(*args))
    return forward, ops


# ----------------------------- pure-JAX reference -------------------------------

def reference_forward(params, graph, b_state):
    """Plain-JAX re-implementation of the PyTorch forward (batched, eval-mode dropout)."""
    emb = params["embedding"]
    eps = params["eps"]
    counts = np.zeros((ENTITY,), np.float32)
    acc = jnp.zeros((ENTITY, HIDDEN), jnp.float32)
    for (src, rel, dst) in RELS:
        s_lo, s_hi = TYPE_OFFSETS[src]
        d_lo, d_hi = TYPE_OFFSETS[dst]
        w, b = params["conv1"][rel]
        acc = acc.at[d_lo:d_hi].add(graph["adj"][rel] @ (emb[s_lo:s_hi] @ w) + b)
        counts[d_lo:d_hi] += 1.0
    gnn = acc / jnp.asarray(np.maximum(counts, 1.0))[:, None]
    gnn = jnp.where(gnn >= 0, gnn, 0.2 * gnn)

    samp = [s["adj"] @ (emb[s["neighbors"]] @ params["gcn_w"]) + params["gcn_b"]
            for s in b_state]
    Lmax = max(int(s["cur_node"].shape[0]) for s in b_state)
    bases, rejs = [], []
    for o, s in zip(samp, b_state):
        L = int(s["cur_node"].shape[0])
        se = (1.0 - eps) * o[:L] + eps * gnn[s["cur_node"]]
        se = jnp.pad(se, ((0, Lmax - L), (0, 0)))
        bases.append(jnp.concatenate([gnn[s["user"]], se], axis=0))
        rf = (jnp.mean(gnn[jnp.asarray(s["rej_feature"], jnp.int32)], axis=0)
              if len(s["rej_feature"]) else jnp.zeros((HIDDEN,), jnp.float32))
        ri = (jnp.mean(gnn[jnp.asarray(s["rej_item"], jnp.int32)], axis=0)
              if len(s["rej_item"]) else jnp.zeros((HIDDEN,), jnp.float32))
        rejs.append(rf + ri)
    interest = jnp.stack(bases, axis=0)                           # (B, 1+Lmax, H)
    mm = jax.nn.relu(jnp.stack(rejs) @ params["fc_neg_w"] + params["fc_neg_b"])
    interest = jnp.concatenate([interest, mm[:, None, :]], axis=1)

    outs = []
    for h in range(NUM_PERS):
        w1, b1, w2, b2 = params["attn_init"][h]
        s1 = jax.nn.sigmoid(interest @ w1 + b1[0, 0])
        sm = jax.nn.softmax(s1 * w2 + b2, axis=0)                 # legacy F.softmax dim=0
        ctx0 = jnp.sum(sm * interest, axis=1)
        wa, wb, b1r, w2r, b2r = params["attn_ref"][h]
        s1r = jax.nn.sigmoid(interest @ wa + (ctx0 @ wb)[:, None, :] + b1r[0, 0])
        smr = jax.nn.softmax(s1r * w2r + b2r + sm, axis=0)
        outs.append(jnp.sum(smr * interest, axis=1))
    return jnp.stack(outs, axis=0)                                # (P, B, H)


# ----------------------------- main ---------------------------------------------

if __name__ == "__main__":
    params, graph = build_params_and_graph(seed=0)
    b_state = build_b_state(seed=1)
    B = len(b_state)

    forward, ops = build_forward(params, graph, b_state)
    ctx = jax.block_until_ready(forward(*ops))                    # (P*B, HPAD)

    # Slice back to the true hidden size (100) and present as the reference output list.
    ctx_np = np.asarray(ctx).reshape(NUM_PERS, B, HPAD)[:, :, :HIDDEN]
    out = [jnp.asarray(ctx_np[h])[:, None, :] for h in range(NUM_PERS)]

    # Correctness check against a plain-JAX re-implementation of the torch forward.
    with jax.default_matmul_precision("highest"):
        ref = np.asarray(reference_forward(params, graph, b_state))
    np.testing.assert_allclose(ctx_np, ref, rtol=1e-1, atol=1e-2)

    assert len(out) == NUM_PERS
    for o in out:
        assert o.shape == (B, 1, HIDDEN), o.shape
        assert bool(jnp.all(jnp.isfinite(o)))
    print("KERNEL_OK")
</pallas_src>

<mosaic_0001>
module attributes {stable_mosaic.version = 11 : i64} {
  func.func @graph_encoder_kernel(%arg0: memref<112x224xf32, #tpu.memory_space<vmem>>, %arg1: memref<224x128xf32, #tpu.memory_space<vmem>>, %arg2: memref<16x112xf32, #tpu.memory_space<vmem>>, %arg3: memref<16x128xf32, #tpu.memory_space<vmem>>, %arg4: memref<16x32xf32, #tpu.memory_space<vmem>>, %arg5: memref<16x16xf32, #tpu.memory_space<vmem>>, %arg6: memref<32x128xf32, #tpu.memory_space<vmem>>, %arg7: memref<1x128xf32, #tpu.memory_space<vmem>>, %arg8: memref<16x16xf32, #tpu.memory_space<vmem>>, %arg9: memref<16x16xf32, #tpu.memory_space<vmem>>, %arg10: memref<8x16xf32, #tpu.memory_space<vmem>>, %arg11: memref<16x8xf32, #tpu.memory_space<vmem>>, %arg12: memref<128x128xf32, #tpu.memory_space<vmem>>, %arg13: memref<1x128xf32, #tpu.memory_space<vmem>>, %arg14: memref<128x8xf32, #tpu.memory_space<vmem>>, %arg15: memref<128x4xf32, #tpu.memory_space<vmem>>, %arg16: memref<4x1x1xf32, #tpu.memory_space<vmem>>, %arg17: memref<4x1x128xf32, #tpu.memory_space<vmem>>, %arg18: memref<4x1x128xf32, #tpu.memory_space<vmem>>, %arg19: memref<4x1x1xf32, #tpu.memory_space<vmem>>, %arg20: memref<4x1x128xf32, #tpu.memory_space<vmem>>, %arg21: memref<4x1x128xf32, #tpu.memory_space<vmem>>, %arg22: memref<8x128xf32, #tpu.memory_space<vmem>>) attributes {dimension_semantics = [], scalar_prefetch = 0 : i64, scratch_operands = 0 : i64, tpu.core_type = #tpu.core_type<tc>} {
    %c0 = arith.constant 0 : index
    %c0_0 = arith.constant 0 : index
    %0 = vector.load %arg0[%c0, %c0_0] : memref<112x224xf32, #tpu.memory_space<vmem>>, vector<112x224xf32>
    %c0_1 = arith.constant 0 : index
    %c0_2 = arith.constant 0 : index
    %1 = vector.load %arg1[%c0_1, %c0_2] : memref<224x128xf32, #tpu.memory_space<vmem>>, vector<224x128xf32>
    %cst = arith.constant dense<0.000000e+00> : vector<112x128xf32>
    %2 = tpu.matmul %0, %1, %cst {dimension_numbers = #tpu.dot_dimension_numbers<[1], [0], [0], [1], [0, 0, 1, 1], [], []>} : vector<112x224xf32>, vector<224x128xf32>, vector<112x128xf32> -> vector<112x128xf32>
    %c0_3 = arith.constant 0 : index
    %c0_4 = arith.constant 0 : index
    %3 = vector.load %arg2[%c0_3, %c0_4] : memref<16x112xf32, #tpu.memory_space<vmem>>, vector<16x112xf32>
    %cst_5 = arith.constant dense<0.000000e+00> : vector<16x128xf32>
    %4 = tpu.matmul %3, %2, %cst_5 {dimension_numbers = #tpu.dot_dimension_numbers<[1], [0], [0], [1], [0, 0, 1, 1], [], []>} : vector<16x112xf32>, vector<112x128xf32>, vector<16x128xf32> -> vector<16x128xf32>
    %c0_6 = arith.constant 0 : index
    %c0_7 = arith.constant 0 : index
    %5 = vector.load %arg3[%c0_6, %c0_7] : memref<16x128xf32, #tpu.memory_space<vmem>>, vector<16x128xf32>
    %6 = arith.addf %4, %5 : vector<16x128xf32>
    %cst_8 = arith.constant 0.000000e+00 : f32
    %7 = vector.broadcast %cst_8 : f32 to vector<16x128xf32>
    %8 = arith.cmpf oge, %6, %7 : vector<16x128xf32>
    %cst_9 = arith.constant 2.000000e-01 : f32
    %9 = vector.broadcast %cst_9 : f32 to vector<16x128xf32>
    %10 = arith.mulf %9, %6 : vector<16x128xf32>
    %11 = arith.select %8, %6, %10 : vector<16x128xi1>, vector<16x128xf32>
    %c0_10 = arith.constant 0 : index
    %c0_11 = arith.constant 0 : index
    %12 = vector.load %arg4[%c0_10, %c0_11] : memref<16x32xf32, #tpu.memory_space<vmem>>, vector<16x32xf32>
    %c0_12 = arith.constant 0 : index
    %c0_13 = arith.constant 0 : index
    %13 = vector.load %arg6[%c0_12, %c0_13] : memref<32x128xf32, #tpu.memory_space<vmem>>, vector<32x128xf32>
    %cst_14 = arith.constant dense<0.000000e+00> : vector<16x128xf32>
    %14 = tpu.matmul %12, %13, %cst_14 {dimension_numbers = #tpu.dot_dimension_numbers<[1], [0], [0], [1], [0, 0, 1, 1], [], []>} : vector<16x32xf32>, vector<32x128xf32>, vector<16x128xf32> -> vector<16x128xf32>
    %c0_15 = arith.constant 0 : index
    %c0_16 = arith.constant 0 : index
    %15 = vector.load %arg5[%c0_15, %c0_16] : memref<16x16xf32, #tpu.memory_space<vmem>>, vector<16x16xf32>
    %cst_17 = arith.constant dense<0.000000e+00> : vector<16x128xf32>
    %16 = tpu.matmul %15, %14, %cst_17 {dimension_numbers = #tpu.dot_dimension_numbers<[1], [0], [0], [1], [0, 0, 1, 1], [], []>} : vector<16x16xf32>, vector<16x128xf32>, vector<16x128xf32> -> vector<16x128xf32>
    %c0_18 = arith.constant 0 : index
    %c0_19 = arith.constant 0 : index
    %17 = vector.load %arg7[%c0_18, %c0_19] : memref<1x128xf32, #tpu.memory_space<vmem>>, vector<1x128xf32>
    %18 = vector.broadcast %17 : vector<1x128xf32> to vector<16x128xf32>
    %19 = arith.addf %16, %18 : vector<16x128xf32>
    %c0_20 = arith.constant 0 : index
    %c0_21 = arith.constant 0 : index
    %20 = vector.load %arg10[%c0_20, %c0_21] : memref<8x16xf32, #tpu.memory_space<vmem>>, vector<8x16xf32>
    %cst_22 = arith.constant dense<0.000000e+00> : vector<8x128xf32>
    %21 = tpu.matmul %20, %11, %cst_22 {dimension_numbers = #tpu.dot_dimension_numbers<[1], [0], [0], [1], [0, 0, 1, 1], [], []>} : vector<8x16xf32>, vector<16x128xf32>, vector<8x128xf32> -> vector<8x128xf32>
    %c0_23 = arith.constant 0 : index
    %c0_24 = arith.constant 0 : index
    %22 = vector.load %arg12[%c0_23, %c0_24] : memref<128x128xf32, #tpu.memory_space<vmem>>, vector<128x128xf32>
    %cst_25 = arith.constant dense<0.000000e+00> : vector<8x128xf32>
    %23 = tpu.matmul %21, %22, %cst_25 {dimension_numbers = #tpu.dot_dimension_numbers<[1], [0], [0], [1], [0, 0, 1, 1], [], []>} : vector<8x128xf32>, vector<128x128xf32>, vector<8x128xf32> -> vector<8x128xf32>
    %c0_26 = arith.constant 0 : index
    %c0_27 = arith.constant 0 : index
    %24 = vector.load %arg13[%c0_26, %c0_27] : memref<1x128xf32, #tpu.memory_space<vmem>>, vector<1x128xf32>
    %25 = vector.broadcast %24 : vector<1x128xf32> to vector<8x128xf32>
    %26 = arith.addf %23, %25 : vector<8x128xf32>
    %cst_28 = arith.constant 0.000000e+00 : f32
    %27 = vector.broadcast %cst_28 : f32 to vector<8x128xf32>
    %28 = arith.maximumf %26, %27 : vector<8x128xf32>
    %c0_29 = arith.constant 0 : index
    %c0_30 = arith.constant 0 : index
    %29 = vector.load %arg8[%c0_29, %c0_30] : memref<16x16xf32, #tpu.memory_space<vmem>>, vector<16x16xf32>
    %cst_31 = arith.constant dense<0.000000e+00> : vector<16x128xf32>
    %30 = tpu.matmul %29, %11, %cst_31 {dimension_numbers = #tpu.dot_dimension_numbers<[1], [0], [0], [1], [0, 0, 1, 1], [], []>} : vector<16x16xf32>, vector<16x128xf32>, vector<16x128xf32> -> vector<16x128xf32>
    %c0_32 = arith.constant 0 : index
    %c0_33 = arith.constant 0 : index
    %31 = vector.load %arg9[%c0_32, %c0_33] : memref<16x16xf32, #tpu.memory_space<vmem>>, vector<16x16xf32>
    %cst_34 = arith.constant dense<0.000000e+00> : vector<16x128xf32>
    %32 = tpu.matmul %31, %19, %cst_34 {dimension_numbers = #tpu.dot_dimension_numbers<[1], [0], [0], [1], [0, 0, 1, 1], [], []>} : vector<16x16xf32>, vector<16x128xf32>, vector<16x128xf32> -> vector<16x128xf32>
    %33 = arith.addf %30, %32 : vector<16x128xf32>
    %c0_35 = arith.constant 0 : index
    %c0_36 = arith.constant 0 : index
    %34 = vector.load %arg11[%c0_35, %c0_36] : memref<16x8xf32, #tpu.memory_space<vmem>>, vector<16x8xf32>
    %cst_37 = arith.constant dense<0.000000e+00> : vector<16x128xf32>
    %35 = tpu.matmul %34, %28, %cst_37 {dimension_numbers = #tpu.dot_dimension_numbers<[1], [0], [0], [1], [0, 0, 1, 1], [], []>} : vector<16x8xf32>, vector<8x128xf32>, vector<16x128xf32> -> vector<16x128xf32>
    %36 = arith.addf %33, %35 : vector<16x128xf32>
    %37 = vector.shape_cast %36 : vector<16x128xf32> to vector<2x8x128xf32>
    %c0_38 = arith.constant 0 : index
    %c0_39 = arith.constant 0 : index
    %38 = vector.load %arg14[%c0_38, %c0_39] : memref<128x8xf32, #tpu.memory_space<vmem>>, vector<128x8xf32>
    %cst_40 = arith.constant dense<0.000000e+00> : vector<16x8xf32>
    %39 = tpu.matmul %36, %38, %cst_40 {dimension_numbers = #tpu.dot_dimension_numbers<[1], [0], [0], [1], [0, 0, 1, 1], [], []>} : vector<16x128xf32>, vector<128x8xf32>, vector<16x8xf32> -> vector<16x8xf32>
    %40 = vector.extract_strided_slice %39 {offsets = [0, 0], sizes = [16, 1], strides = [1, 1]} : vector<16x8xf32> to vector<16x1xf32>
    %41 = vector.shape_cast %40 : vector<16x1xf32> to vector<2x8x1xf32>
    %c0_41 = arith.constant 0 : index
    %c0_42 = arith.constant 0 : index
    %c0_43 = arith.constant 0 : index
    %42 = vector.load %arg16[%c0_41, %c0_42, %c0_43] : memref<4x1x1xf32, #tpu.memory_space<vmem>>, vector<1x1x1xf32>
    %43 = vector.shape_cast %42 : vector<1x1x1xf32> to vector<1x1xf32>
    %44 = vector.shape_cast %43 : vector<1x1xf32> to vector<1x1x1xf32>
    %45 = vector.broadcast %44 : vector<1x1x1xf32> to vector<2x8x1xf32>
    %46 = arith.addf %41, %45 : vector<2x8x1xf32>
    %47 = arith.negf %46 : vector<2x8x1xf32>
    %48 = math.exp %47 : vector<2x8x1xf32>
    %cst_44 = arith.constant 1.000000e+00 : f32
    %49 = vector.broadcast %cst_44 : f32 to vector<2x8x1xf32>
    %50 = arith.addf %49, %48 : vector<2x8x1xf32>
    %51 = arith.divf %49, %50 : vector<2x8x1xf32>
    %c0_45 = arith.constant 0 : index
    %c0_46 = arith.constant 0 : index
    %c0_47 = arith.constant 0 : index
    %52 = vector.load %arg17[%c0_45, %c0_46, %c0_47] : memref<4x1x128xf32, #tpu.memory_space<vmem>>, vector<1x1x128xf32>
    %53 = vector.shape_cast %52 : vector<1x1x128xf32> to vector<1x128xf32>
    %54 = vector.shape_cast %53 : vector<1x128xf32> to vector<1x1x128xf32>
    %55 = vector.broadcast %51 : vector<2x8x1xf32> to vector<2x8x128xf32>
    %56 = vector.broadcast %54 : vector<1x1x128xf32> to vector<2x8x128xf32>
    %57 = arith.mulf %55, %56 : vector<2x8x128xf32>
    %c0_48 = arith.constant 0 : index
    %c0_49 = arith.constant 0 : index
    %c0_50 = arith.constant 0 : index
    %58 = vector.load %arg18[%c0_48, %c0_49, %c0_50] : memref<4x1x128xf32, #tpu.memory_space<vmem>>, vector<1x1x128xf32>
    %59 = vector.shape_cast %58 : vector<1x1x128xf32> to vector<1x128xf32>
    %60 = vector.shape_cast %59 : vector<1x128xf32> to vector<1x1x128xf32>
    %61 = vector.broadcast %60 : vector<1x1x128xf32> to vector<2x8x128xf32>
    %62 = arith.addf %57, %61 : vector<2x8x128xf32>
    %cst_51 = arith.constant dense<0xFF800000> : vector<8x128xf32>
    %63 = vector.multi_reduction <maximumf>, %62, %cst_51 [0] : vector<2x8x128xf32> to vector<8x128xf32>
    %64 = vector.shape_cast %63 : vector<8x128xf32> to vector<1x8x128xf32>
    %65 = vector.broadcast %64 : vector<1x8x128xf32> to vector<2x8x128xf32>
    %66 = arith.subf %62, %65 : vector<2x8x128xf32>
    %67 = math.exp %66 : vector<2x8x128xf32>
    %cst_52 = arith.constant dense<0.000000e+00> : vector<8x128xf32>
    %68 = vector.multi_reduction <add>, %67, %cst_52 [0] : vector<2x8x128xf32> to vector<8x128xf32>
    %69 = vector.shape_cast %68 : vector<8x128xf32> to vector<1x8x128xf32>
    %70 = tpu.reciprocal %69 {approx = true} : vector<1x8x128xf32> -> vector<1x8x128xf32>
    %71 = vector.broadcast %70 : vector<1x8x128xf32> to vector<2x8x128xf32>
    %72 = arith.mulf %67, %71 : vector<2x8x128xf32>
    %73 = arith.mulf %72, %37 : vector<2x8x128xf32>
    %cst_53 = arith.constant dense<0.000000e+00> : vector<2x128xf32>
    %74 = vector.multi_reduction <add>, %73, %cst_53 [1] : vector<2x8x128xf32> to vector<2x128xf32>
    %75 = vector.extract_strided_slice %39 {offsets = [0, 1], sizes = [16, 1], strides = [1, 1]} : vector<16x8xf32> to vector<16x1xf32>
    %76 = vector.shape_cast %75 : vector<16x1xf32> to vector<2x8x1xf32>
    %c1 = arith.constant 1 : index
    %c0_54 = arith.constant 0 : index
    %c0_55 = arith.constant 0 : index
    %77 = vector.load %arg16[%c1, %c0_54, %c0_55] : memref<4x1x1xf32, #tpu.memory_space<vmem>>, vector<1x1x1xf32>
    %78 = vector.shape_cast %77 : vector<1x1x1xf32> to vector<1x1xf32>
    %79 = vector.shape_cast %78 : vector<1x1xf32> to vector<1x1x1xf32>
    %80 = vector.broadcast %79 : vector<1x1x1xf32> to vector<2x8x1xf32>
    %81 = arith.addf %76, %80 : vector<2x8x1xf32>
    %82 = arith.negf %81 : vector<2x8x1xf32>
    %83 = math.exp %82 : vector<2x8x1xf32>
    %cst_56 = arith.constant 1.000000e+00 : f32
    %84 = vector.broadcast %cst_56 : f32 to vector<2x8x1xf32>
    %85 = arith.addf %84, %83 : vector<2x8x1xf32>
    %86 = arith.divf %84, %85 : vector<2x8x1xf32>
    %c1_57 = arith.constant 1 : index
    %c0_58 = arith.constant 0 : index
    %c0_59 = arith.constant 0 : index
    %87 = vector.load %arg17[%c1_57, %c0_58, %c0_59] : memref<4x1x128xf32, #tpu.memory_space<vmem>>, vector<1x1x128xf32>
    %88 = vector.shape_cast %87 : vector<1x1x128xf32> to vector<1x128xf32>
    %89 = vector.shape_cast %88 : vector<1x128xf32> to vector<1x1x128xf32>
    %90 = vector.broadcast %86 : vector<2x8x1xf32> to vector<2x8x128xf32>
    %91 = vector.broadcast %89 : vector<1x1x128xf32> to vector<2x8x128xf32>
    %92 = arith.mulf %90, %91 : vector<2x8x128xf32>
    %c1_60 = arith.constant 1 : index
    %c0_61 = arith.constant 0 : index
    %c0_62 = arith.constant 0 : index
    %93 = vector.load %arg18[%c1_60, %c0_61, %c0_62] : memref<4x1x128xf32, #tpu.memory_space<vmem>>, vector<1x1x128xf32>
    %94 = vector.shape_cast %93 : vector<1x1x128xf32> to vector<1x128xf32>
    %95 = vector.shape_cast %94 : vector<1x128xf32> to vector<1x1x128xf32>
    %96 = vector.broadcast %95 : vector<1x1x128xf32> to vector<2x8x128xf32>
    %97 = arith.addf %92, %96 : vector<2x8x128xf32>
    %cst_63 = arith.constant dense<0xFF800000> : vector<8x128xf32>
    %98 = vector.multi_reduction <maximumf>, %97, %cst_63 [0] : vector<2x8x128xf32> to vector<8x128xf32>
    %99 = vector.shape_cast %98 : vector<8x128xf32> to vector<1x8x128xf32>
    %100 = vector.broadcast %99 : vector<1x8x128xf32> to vector<2x8x128xf32>
    %101 = arith.subf %97, %100 : vector<2x8x128xf32>
    %102 = math.exp %101 : vector<2x8x128xf32>
    %cst_64 = arith.constant dense<0.000000e+00> : vector<8x128xf32>
    %103 = vector.multi_reduction <add>, %102, %cst_64 [0] : vector<2x8x128xf32> to vector<8x128xf32>
    %104 = vector.shape_cast %103 : vector<8x128xf32> to vector<1x8x128xf32>
    %105 = tpu.reciprocal %104 {approx = true} : vector<1x8x128xf32> -> vector<1x8x128xf32>
    %106 = vector.broadcast %105 : vector<1x8x128xf32> to vector<2x8x128xf32>
    %107 = arith.mulf %102, %106 : vector<2x8x128xf32>
    %108 = arith.mulf %107, %37 : vector<2x8x128xf32>
    %cst_65 = arith.constant dense<0.000000e+00> : vector<2x128xf32>
    %109 = vector.multi_reduction <add>, %108, %cst_65 [1] : vector<2x8x128xf32> to vector<2x128xf32>
    %110 = vector.extract_strided_slice %39 {offsets = [0, 2], sizes = [16, 1], strides = [1, 1]} : vector<16x8xf32> to vector<16x1xf32>
    %111 = vector.shape_cast %110 : vector<16x1xf32> to vector<2x8x1xf32>
    %c2 = arith.constant 2 : index
    %c0_66 = arith.constant 0 : index
    %c0_67 = arith.constant 0 : index
    %112 = vector.load %arg16[%c2, %c0_66, %c0_67] : memref<4x1x1xf32, #tpu.memory_space<vmem>>, vector<1x1x1xf32>
    %113 = vector.shape_cast %112 : vector<1x1x1xf32> to vector<1x1xf32>
    %114 = vector.shape_cast %113 : vector<1x1xf32> to vector<1x1x1xf32>
    %115 = vector.broadcast %114 : vector<1x1x1xf32> to vector<2x8x1xf32>
    %116 = arith.addf %111, %115 : vector<2x8x1xf32>
    %117 = arith.negf %116 : vector<2x8x1xf32>
    %118 = math.exp %117 : vector<2x8x1xf32>
    %cst_68 = arith.constant 1.000000e+00 : f32
    %119 = vector.broadcast %cst_68 : f32 to vector<2x8x1xf32>
    %120 = arith.addf %119, %118 : vector<2x8x1xf32>
    %121 = arith.divf %119, %120 : vector<2x8x1xf32>
    %c2_69 = arith.constant 2 : index
    %c0_70 = arith.constant 0 : index
    %c0_71 = arith.constant 0 : index
    %122 = vector.load %arg17[%c2_69, %c0_70, %c0_71] : memref<4x1x128xf32, #tpu.memory_space<vmem>>, vector<1x1x128xf32>
    %123 = vector.shape_cast %122 : vector<1x1x128xf32> to vector<1x128xf32>
    %124 = vector.shape_cast %123 : vector<1x128xf32> to vector<1x1x128xf32>
    %125 = vector.broadcast %121 : vector<2x8x1xf32> to vector<2x8x128xf32>
    %126 = vector.broadcast %124 : vector<1x1x128xf32> to vector<2x8x128xf32>
    %127 = arith.mulf %125, %126 : vector<2x8x128xf32>
    %c2_72 = arith.constant 2 : index
    %c0_73 = arith.constant 0 : index
    %c0_74 = arith.constant 0 : index
    %128 = vector.load %arg18[%c2_72, %c0_73, %c0_74] : memref<4x1x128xf32, #tpu.memory_space<vmem>>, vector<1x1x128xf32>
    %129 = vector.shape_cast %128 : vector<1x1x128xf32> to vector<1x128xf32>
    %130 = vector.shape_cast %129 : vector<1x128xf32> to vector<1x1x128xf32>
    %131 = vector.broadcast %130 : vector<1x1x128xf32> to vector<2x8x128xf32>
    %132 = arith.addf %127, %131 : vector<2x8x128xf32>
    %cst_75 = arith.constant dense<0xFF800000> : vector<8x128xf32>
    %133 = vector.multi_reduction <maximumf>, %132, %cst_75 [0] : vector<2x8x128xf32> to vector<8x128xf32>
    %134 = vector.shape_cast %133 : vector<8x128xf32> to vector<1x8x128xf32>
    %135 = vector.broadcast %134 : vector<1x8x128xf32> to vector<2x8x128xf32>
    %136 = arith.subf %132, %135 : vector<2x8x128xf32>
    %137 = math.exp %136 : vector<2x8x128xf32>
    %cst_76 = arith.constant dense<0.000000e+00> : vector<8x128xf32>
    %138 = vector.multi_reduction <add>, %137, %cst_76 [0] : vector<2x8x128xf32> to vector<8x128xf32>
    %139 = vector.shape_cast %138 : vector<8x128xf32> to vector<1x8x128xf32>
    %140 = tpu.reciprocal %139 {approx = true} : vector<1x8x128xf32> -> vector<1x8x128xf32>
    %141 = vector.broadcast %140 : vector<1x8x128xf32> to vector<2x8x128xf32>
    %142 = arith.mulf %137, %141 : vector<2x8x128xf32>
    %143 = arith.mulf %142, %37 : vector<2x8x128xf32>
    %cst_77 = arith.constant dense<0.000000e+00> : vector<2x128xf32>
    %144 = vector.multi_reduction <add>, %143, %cst_77 [1] : vector<2x8x128xf32> to vector<2x128xf32>
    %145 = vector.extract_strided_slice %39 {offsets = [0, 3], sizes = [16, 1], strides = [1, 1]} : vector<16x8xf32> to vector<16x1xf32>
    %146 = vector.shape_cast %145 : vector<16x1xf32> to vector<2x8x1xf32>
    %c3 = arith.constant 3 : index
    %c0_78 = arith.constant 0 : index
    %c0_79 = arith.constant 0 : index
    %147 = vector.load %arg16[%c3, %c0_78, %c0_79] : memref<4x1x1xf32, #tpu.memory_space<vmem>>, vector<1x1x1xf32>
    %148 = vector.shape_cast %147 : vector<1x1x1xf32> to vector<1x1xf32>
    %149 = vector.shape_cast %148 : vector<1x1xf32> to vector<1x1x1xf32>
    %150 = vector.broadcast %149 : vector<1x1x1xf32> to vector<2x8x1xf32>
    %151 = arith.addf %146, %150 : vector<2x8x1xf32>
    %152 = arith.negf %151 : vector<2x8x1xf32>
    %153 = math.exp %152 : vector<2x8x1xf32>
    %cst_80 = arith.constant 1.000000e+00 : f32
    %154 = vector.broadcast %cst_80 : f32 to vector<2x8x1xf32>
    %155 = arith.addf %154, %153 : vector<2x8x1xf32>
    %156 = arith.divf %154, %155 : vector<2x8x1xf32>
    %c3_81 = arith.constant 3 : index
    %c0_82 = arith.constant 0 : index
    %c0_83 = arith.constant 0 : index
    %157 = vector.load %arg17[%c3_81, %c0_82, %c0_83] : memref<4x1x128xf32, #tpu.memory_space<vmem>>, vector<1x1x128xf32>
    %158 = vector.shape_cast %157 : vector<1x1x128xf32> to vector<1x128xf32>
    %159 = vector.shape_cast %158 : vector<1x128xf32> to vector<1x1x128xf32>
    %160 = vector.broadcast %156 : vector<2x8x1xf32> to vector<2x8x128xf32>
    %161 = vector.broadcast %159 : vector<1x1x128xf32> to vector<2x8x128xf32>
    %162 = arith.mulf %160, %161 : vector<2x8x128xf32>
    %c3_84 = arith.constant 3 : index
    %c0_85 = arith.constant 0 : index
    %c0_86 = arith.constant 0 : index
    %163 = vector.load %arg18[%c3_84, %c0_85, %c0_86] : memref<4x1x128xf32, #tpu.memory_space<vmem>>, vector<1x1x128xf32>
    %164 = vector.shape_cast %163 : vector<1x1x128xf32> to vector<1x128xf32>
    %165 = vector.shape_cast %164 : vector<1x128xf32> to vector<1x1x128xf32>
    %166 = vector.broadcast %165 : vector<1x1x128xf32> to vector<2x8x128xf32>
    %167 = arith.addf %162, %166 : vector<2x8x128xf32>
    %cst_87 = arith.constant dense<0xFF800000> : vector<8x128xf32>
    %168 = vector.multi_reduction <maximumf>, %167, %cst_87 [0] : vector<2x8x128xf32> to vector<8x128xf32>
    %169 = vector.shape_cast %168 : vector<8x128xf32> to vector<1x8x128xf32>
    %170 = vector.broadcast %169 : vector<1x8x128xf32> to vector<2x8x128xf32>
    %171 = arith.subf %167, %170 : vector<2x8x128xf32>
    %172 = math.exp %171 : vector<2x8x128xf32>
    %cst_88 = arith.constant dense<0.000000e+00> : vector<8x128xf32>
    %173 = vector.multi_reduction <add>, %172, %cst_88 [0] : vector<2x8x128xf32> to vector<8x128xf32>
    %174 = vector.shape_cast %173 : vector<8x128xf32> to vector<1x8x128xf32>
    %175 = tpu.reciprocal %174 {approx = true} : vector<1x8x128xf32> -> vector<1x8x128xf32>
    %176 = vector.broadcast %175 : vector<1x8x128xf32> to vector<2x8x128xf32>
    %177 = arith.mulf %172, %176 : vector<2x8x128xf32>
    %178 = arith.mulf %177, %37 : vector<2x8x128xf32>
    %cst_89 = arith.constant dense<0.000000e+00> : vector<2x128xf32>
    %179 = vector.multi_reduction <add>, %178, %cst_89 [1] : vector<2x8x128xf32> to vector<2x128xf32>
    %180 = tpu.concatenate %74, %109, %144, %179 in 0 : vector<2x128xf32>, vector<2x128xf32>, vector<2x128xf32>, vector<2x128xf32> -> vector<8x128xf32>
    %c0_90 = arith.constant 0 : index
    %c0_91 = arith.constant 0 : index
    %181 = vector.load %arg15[%c0_90, %c0_91] : memref<128x4xf32, #tpu.memory_space<vmem>>, vector<128x4xf32>
    %cst_92 = arith.constant dense<0.000000e+00> : vector<8x4xf32>
    %182 = tpu.matmul %180, %181, %cst_92 {dimension_numbers = #tpu.dot_dimension_numbers<[1], [0], [0], [1], [0, 0, 1, 1], [], []>} : vector<8x128xf32>, vector<128x4xf32>, vector<8x4xf32> -> vector<8x4xf32>
    %183 = vector.extract_strided_slice %39 {offsets = [0, 4], sizes = [16, 1], strides = [1, 1]} : vector<16x8xf32> to vector<16x1xf32>
    %184 = vector.shape_cast %183 : vector<16x1xf32> to vector<2x8x1xf32>
    %185 = vector.extract_strided_slice %182 {offsets = [0, 0], sizes = [2, 1], strides = [1, 1]} : vector<8x4xf32> to vector<2x1xf32>
    %186 = vector.shape_cast %185 : vector<2x1xf32> to vector<2x1x1xf32>
    %187 = vector.broadcast %186 : vector<2x1x1xf32> to vector<2x8x1xf32>
    %188 = arith.addf %184, %187 : vector<2x8x1xf32>
    %c0_93 = arith.constant 0 : index
    %c0_94 = arith.constant 0 : index
    %c0_95 = arith.constant 0 : index
    %189 = vector.load %arg19[%c0_93, %c0_94, %c0_95] : memref<4x1x1xf32, #tpu.memory_space<vmem>>, vector<1x1x1xf32>
    %190 = vector.shape_cast %189 : vector<1x1x1xf32> to vector<1x1xf32>
    %191 = vector.shape_cast %190 : vector<1x1xf32> to vector<1x1x1xf32>
    %192 = vector.broadcast %191 : vector<1x1x1xf32> to vector<2x8x1xf32>
    %193 = arith.addf %188, %192 : vector<2x8x1xf32>
    %194 = arith.negf %193 : vector<2x8x1xf32>
    %195 = math.exp %194 : vector<2x8x1xf32>
    %cst_96 = arith.constant 1.000000e+00 : f32
    %196 = vector.broadcast %cst_96 : f32 to vector<2x8x1xf32>
    %197 = arith.addf %196, %195 : vector<2x8x1xf32>
    %198 = arith.divf %196, %197 : vector<2x8x1xf32>
    %c0_97 = arith.constant 0 : index
    %c0_98 = arith.constant 0 : index
    %c0_99 = arith.constant 0 : index
    %199 = vector.load %arg20[%c0_97, %c0_98, %c0_99] : memref<4x1x128xf32, #tpu.memory_space<vmem>>, vector<1x1x128xf32>
    %200 = vector.shape_cast %199 : vector<1x1x128xf32> to vector<1x128xf32>
    %201 = vector.shape_cast %200 : vector<1x128xf32> to vector<1x1x128xf32>
    %202 = vector.broadcast %198 : vector<2x8x1xf32> to vector<2x8x128xf32>
    %203 = vector.broadcast %201 : vector<1x1x128xf32> to vector<2x8x128xf32>
    %204 = arith.mulf %202, %203 : vector<2x8x128xf32>
    %c0_100 = arith.constant 0 : index
    %c0_101 = arith.constant 0 : index
    %c0_102 = arith.constant 0 : index
    %205 = vector.load %arg21[%c0_100, %c0_101, %c0_102] : memref<4x1x128xf32, #tpu.memory_space<vmem>>, vector<1x1x128xf32>
    %206 = vector.shape_cast %205 : vector<1x1x128xf32> to vector<1x128xf32>
    %207 = vector.shape_cast %206 : vector<1x128xf32> to vector<1x1x128xf32>
    %208 = vector.broadcast %207 : vector<1x1x128xf32> to vector<2x8x128xf32>
    %209 = arith.addf %204, %208 : vector<2x8x128xf32>
    %210 = arith.addf %209, %72 : vector<2x8x128xf32>
    %cst_103 = arith.constant dense<0xFF800000> : vector<8x128xf32>
    %211 = vector.multi_reduction <maximumf>, %210, %cst_103 [0] : vector<2x8x128xf32> to vector<8x128xf32>
    %212 = vector.shape_cast %211 : vector<8x128xf32> to vector<1x8x128xf32>
    %213 = vector.broadcast %212 : vector<1x8x128xf32> to vector<2x8x128xf32>
    %214 = arith.subf %210, %213 : vector<2x8x128xf32>
    %215 = math.exp %214 : vector<2x8x128xf32>
    %cst_104 = arith.constant dense<0.000000e+00> : vector<8x128xf32>
    %216 = vector.multi_reduction <add>, %215, %cst_104 [0] : vector<2x8x128xf32> to vector<8x128xf32>
    %217 = vector.shape_cast %216 : vector<8x128xf32> to vector<1x8x128xf32>
    %218 = tpu.reciprocal %217 {approx = true} : vector<1x8x128xf32> -> vector<1x8x128xf32>
    %219 = vector.broadcast %218 : vector<1x8x128xf32> to vector<2x8x128xf32>
    %220 = arith.mulf %215, %219 : vector<2x8x128xf32>
    %221 = arith.mulf %220, %37 : vector<2x8x128xf32>
    %cst_105 = arith.constant dense<0.000000e+00> : vector<2x128xf32>
    %222 = vector.multi_reduction <add>, %221, %cst_105 [1] : vector<2x8x128xf32> to vector<2x128xf32>
    %223 = vector.extract_strided_slice %39 {offsets = [0, 5], sizes = [16, 1], strides = [1, 1]} : vector<16x8xf32> to vector<16x1xf32>
    %224 = vector.shape_cast %223 : vector<16x1xf32> to vector<2x8x1xf32>
    %225 = vector.extract_strided_slice %182 {offsets = [2, 1], sizes = [2, 1], strides = [1, 1]} : vector<8x4xf32> to vector<2x1xf32>
    %226 = vector.shape_cast %225 : vector<2x1xf32> to vector<2x1x1xf32>
    %227 = vector.broadcast %226 : vector<2x1x1xf32> to vector<2x8x1xf32>
    %228 = arith.addf %224, %227 : vector<2x8x1xf32>
    %c1_106 = arith.constant 1 : index
    %c0_107 = arith.constant 0 : index
    %c0_108 = arith.constant 0 : index
    %229 = vector.load %arg19[%c1_106, %c0_107, %c0_108] : memref<4x1x1xf32, #tpu.memory_space<vmem>>, vector<1x1x1xf32>
    %230 = vector.shape_cast %229 : vector<1x1x1xf32> to vector<1x1xf32>
    %231 = vector.shape_cast %230 : vector<1x1xf32> to vector<1x1x1xf32>
    %232 = vector.broadcast %231 : vector<1x1x1xf32> to vector<2x8x1xf32>
    %233 = arith.addf %228, %232 : vector<2x8x1xf32>
    %234 = arith.negf %233 : vector<2x8x1xf32>
    %235 = math.exp %234 : vector<2x8x1xf32>
    %cst_109 = arith.constant 1.000000e+00 : f32
    %236 = vector.broadcast %cst_109 : f32 to vector<2x8x1xf32>
    %237 = arith.addf %236, %235 : vector<2x8x1xf32>
    %238 = arith.divf %236, %237 : vector<2x8x1xf32>
    %c1_110 = arith.constant 1 : index
    %c0_111 = arith.constant 0 : index
    %c0_112 = arith.constant 0 : index
    %239 = vector.load %arg20[%c1_110, %c0_111, %c0_112] : memref<4x1x128xf32, #tpu.memory_space<vmem>>, vector<1x1x128xf32>
    %240 = vector.shape_cast %239 : vector<1x1x128xf32> to vector<1x128xf32>
    %241 = vector.shape_cast %240 : vector<1x128xf32> to vector<1x1x128xf32>
    %242 = vector.broadcast %238 : vector<2x8x1xf32> to vector<2x8x128xf32>
    %243 = vector.broadcast %241 : vector<1x1x128xf32> to vector<2x8x128xf32>
    %244 = arith.mulf %242, %243 : vector<2x8x128xf32>
    %c1_113 = arith.constant 1 : index
    %c0_114 = arith.constant 0 : index
    %c0_115 = arith.constant 0 : index
    %245 = vector.load %arg21[%c1_113, %c0_114, %c0_115] : memref<4x1x128xf32, #tpu.memory_space<vmem>>, vector<1x1x128xf32>
    %246 = vector.shape_cast %245 : vector<1x1x128xf32> to vector<1x128xf32>
    %247 = vector.shape_cast %246 : vector<1x128xf32> to vector<1x1x128xf32>
    %248 = vector.broadcast %247 : vector<1x1x128xf32> to vector<2x8x128xf32>
    %249 = arith.addf %244, %248 : vector<2x8x128xf32>
    %250 = arith.addf %249, %107 : vector<2x8x128xf32>
    %cst_116 = arith.constant dense<0xFF800000> : vector<8x128xf32>
    %251 = vector.multi_reduction <maximumf>, %250, %cst_116 [0] : vector<2x8x128xf32> to vector<8x128xf32>
    %252 = vector.shape_cast %251 : vector<8x128xf32> to vector<1x8x128xf32>
    %253 = vector.broadcast %252 : vector<1x8x128xf32> to vector<2x8x128xf32>
    %254 = arith.subf %250, %253 : vector<2x8x128xf32>
    %255 = math.exp %254 : vector<2x8x128xf32>
    %cst_117 = arith.constant dense<0.000000e+00> : vector<8x128xf32>
    %256 = vector.multi_reduction <add>, %255, %cst_117 [0] : vector<2x8x128xf32> to vector<8x128xf32>
    %257 = vector.shape_cast %256 : vector<8x128xf32> to vector<1x8x128xf32>
    %258 = tpu.reciprocal %257 {approx = true} : vector<1x8x128xf32> -> vector<1x8x128xf32>
    %259 = vector.broadcast %258 : vector<1x8x128xf32> to vector<2x8x128xf32>
    %260 = arith.mulf %255, %259 : vector<2x8x128xf32>
    %261 = arith.mulf %260, %37 : vector<2x8x128xf32>
    %cst_118 = arith.constant dense<0.000000e+00> : vector<2x128xf32>
    %262 = vector.multi_reduction <add>, %261, %cst_118 [1] : vector<2x8x128xf32> to vector<2x128xf32>
    %263 = vector.extract_strided_slice %39 {offsets = [0, 6], sizes = [16, 1], strides = [1, 1]} : vector<16x8xf32> to vector<16x1xf32>
    %264 = vector.shape_cast %263 : vector<16x1xf32> to vector<2x8x1xf32>
    %265 = vector.extract_strided_slice %182 {offsets = [4, 2], sizes = [2, 1], strides = [1, 1]} : vector<8x4xf32> to vector<2x1xf32>
    %266 = vector.shape_cast %265 : vector<2x1xf32> to vector<2x1x1xf32>
    %267 = vector.broadcast %266 : vector<2x1x1xf32> to vector<2x8x1xf32>
    %268 = arith.addf %264, %267 : vector<2x8x1xf32>
    %c2_119 = arith.constant 2 : index
    %c0_120 = arith.constant 0 : index
    %c0_121 = arith.constant 0 : index
    %269 = vector.load %arg19[%c2_119, %c0_120, %c0_121] : memref<4x1x1xf32, #tpu.memory_space<vmem>>, vector<1x1x1xf32>
    %270 = vector.shape_cast %269 : vector<1x1x1xf32> to vector<1x1xf32>
    %271 = vector.shape_cast %270 : vector<1x1xf32> to vector<1x1x1xf32>
    %272 = vector.broadcast %271 : vector<1x1x1xf32> to vector<2x8x1xf32>
    %273 = arith.addf %268, %272 : vector<2x8x1xf32>
    %274 = arith.negf %273 : vector<2x8x1xf32>
    %275 = math.exp %274 : vector<2x8x1xf32>
    %cst_122 = arith.constant 1.000000e+00 : f32
    %276 = vector.broadcast %cst_122 : f32 to vector<2x8x1xf32>
    %277 = arith.addf %276, %275 : vector<2x8x1xf32>
    %278 = arith.divf %276, %277 : vector<2x8x1xf32>
    %c2_123 = arith.constant 2 : index
    %c0_124 = arith.constant 0 : index
    %c0_125 = arith.constant 0 : index
    %279 = vector.load %arg20[%c2_123, %c0_124, %c0_125] : memref<4x1x128xf32, #tpu.memory_space<vmem>>, vector<1x1x128xf32>
    %280 = vector.shape_cast %279 : vector<1x1x128xf32> to vector<1x128xf32>
    %281 = vector.shape_cast %280 : vector<1x128xf32> to vector<1x1x128xf32>
    %282 = vector.broadcast %278 : vector<2x8x1xf32> to vector<2x8x128xf32>
    %283 = vector.broadcast %281 : vector<1x1x128xf32> to vector<2x8x128xf32>
    %284 = arith.mulf %282, %283 : vector<2x8x128xf32>
    %c2_126 = arith.constant 2 : index
    %c0_127 = arith.constant 0 : index
    %c0_128 = arith.constant 0 : index
    %285 = vector.load %arg21[%c2_126, %c0_127, %c0_128] : memref<4x1x128xf32, #tpu.memory_space<vmem>>, vector<1x1x128xf32>
    %286 = vector.shape_cast %285 : vector<1x1x128xf32> to vector<1x128xf32>
    %287 = vector.shape_cast %286 : vector<1x128xf32> to vector<1x1x128xf32>
    %288 = vector.broadcast %287 : vector<1x1x128xf32> to vector<2x8x128xf32>
    %289 = arith.addf %284, %288 : vector<2x8x128xf32>
    %290 = arith.addf %289, %142 : vector<2x8x128xf32>
    %cst_129 = arith.constant dense<0xFF800000> : vector<8x128xf32>
    %291 = vector.multi_reduction <maximumf>, %290, %cst_129 [0] : vector<2x8x128xf32> to vector<8x128xf32>
    %292 = vector.shape_cast %291 : vector<8x128xf32> to vector<1x8x128xf32>
    %293 = vector.broadcast %292 : vector<1x8x128xf32> to vector<2x8x128xf32>
    %294 = arith.subf %290, %293 : vector<2x8x128xf32>
    %295 = math.exp %294 : vector<2x8x128xf32>
    %cst_130 = arith.constant dense<0.000000e+00> : vector<8x128xf32>
    %296 = vector.multi_reduction <add>, %295, %cst_130 [0] : vector<2x8x128xf32> to vector<8x128xf32>
    %297 = vector.shape_cast %296 : vector<8x128xf32> to vector<1x8x128xf32>
    %298 = tpu.reciprocal %297 {approx = true} : vector<1x8x128xf32> -> vector<1x8x128xf32>
    %299 = vector.broadcast %298 : vector<1x8x128xf32> to vector<2x8x128xf32>
    %300 = arith.mulf %295, %299 : vector<2x8x128xf32>
    %301 = arith.mulf %300, %37 : vector<2x8x128xf32>
    %cst_131 = arith.constant dense<0.000000e+00> : vector<2x128xf32>
    %302 = vector.multi_reduction <add>, %301, %cst_131 [1] : vector<2x8x128xf32> to vector<2x128xf32>
    %303 = vector.extract_strided_slice %39 {offsets = [0, 7], sizes = [16, 1], strides = [1, 1]} : vector<16x8xf32> to vector<16x1xf32>
    %304 = vector.shape_cast %303 : vector<16x1xf32> to vector<2x8x1xf32>
    %305 = vector.extract_strided_slice %182 {offsets = [6, 3], sizes = [2, 1], strides = [1, 1]} : vector<8x4xf32> to vector<2x1xf32>
    %306 = vector.shape_cast %305 : vector<2x1xf32> to vector<2x1x1xf32>
    %307 = vector.broadcast %306 : vector<2x1x1xf32> to vector<2x8x1xf32>
    %308 = arith.addf %304, %307 : vector<2x8x1xf32>
    %c3_132 = arith.constant 3 : index
    %c0_133 = arith.constant 0 : index
    %c0_134 = arith.constant 0 : index
    %309 = vector.load %arg19[%c3_132, %c0_133, %c0_134] : memref<4x1x1xf32, #tpu.memory_space<vmem>>, vector<1x1x1xf32>
    %310 = vector.shape_cast %309 : vector<1x1x1xf32> to vector<1x1xf32>
    %311 = vector.shape_cast %310 : vector<1x1xf32> to vector<1x1x1xf32>
    %312 = vector.broadcast %311 : vector<1x1x1xf32> to vector<2x8x1xf32>
    %313 = arith.addf %308, %312 : vector<2x8x1xf32>
    %314 = arith.negf %313 : vector<2x8x1xf32>
    %315 = math.exp %314 : vector<2x8x1xf32>
    %cst_135 = arith.constant 1.000000e+00 : f32
    %316 = vector.broadcast %cst_135 : f32 to vector<2x8x1xf32>
    %317 = arith.addf %316, %315 : vector<2x8x1xf32>
    %318 = arith.divf %316, %317 : vector<2x8x1xf32>
    %c3_136 = arith.constant 3 : index
    %c0_137 = arith.constant 0 : index
    %c0_138 = arith.constant 0 : index
    %319 = vector.load %arg20[%c3_136, %c0_137, %c0_138] : memref<4x1x128xf32, #tpu.memory_space<vmem>>, vector<1x1x128xf32>
    %320 = vector.shape_cast %319 : vector<1x1x128xf32> to vector<1x128xf32>
    %321 = vector.shape_cast %320 : vector<1x128xf32> to vector<1x1x128xf32>
    %322 = vector.broadcast %318 : vector<2x8x1xf32> to vector<2x8x128xf32>
    %323 = vector.broadcast %321 : vector<1x1x128xf32> to vector<2x8x128xf32>
    %324 = arith.mulf %322, %323 : vector<2x8x128xf32>
    %c3_139 = arith.constant 3 : index
    %c0_140 = arith.constant 0 : index
    %c0_141 = arith.constant 0 : index
    %325 = vector.load %arg21[%c3_139, %c0_140, %c0_141] : memref<4x1x128xf32, #tpu.memory_space<vmem>>, vector<1x1x128xf32>
    %326 = vector.shape_cast %325 : vector<1x1x128xf32> to vector<1x128xf32>
    %327 = vector.shape_cast %326 : vector<1x128xf32> to vector<1x1x128xf32>
    %328 = vector.broadcast %327 : vector<1x1x128xf32> to vector<2x8x128xf32>
    %329 = arith.addf %324, %328 : vector<2x8x128xf32>
    %330 = arith.addf %329, %177 : vector<2x8x128xf32>
    %cst_142 = arith.constant dense<0xFF800000> : vector<8x128xf32>
    %331 = vector.multi_reduction <maximumf>, %330, %cst_142 [0] : vector<2x8x128xf32> to vector<8x128xf32>
    %332 = vector.shape_cast %331 : vector<8x128xf32> to vector<1x8x128xf32>
    %333 = vector.broadcast %332 : vector<1x8x128xf32> to vector<2x8x128xf32>
    %334 = arith.subf %330, %333 : vector<2x8x128xf32>
    %335 = math.exp %334 : vector<2x8x128xf32>
    %cst_143 = arith.constant dense<0.000000e+00> : vector<8x128xf32>
    %336 = vector.multi_reduction <add>, %335, %cst_143 [0] : vector<2x8x128xf32> to vector<8x128xf32>
    %337 = vector.shape_cast %336 : vector<8x128xf32> to vector<1x8x128xf32>
    %338 = tpu.reciprocal %337 {approx = true} : vector<1x8x128xf32> -> vector<1x8x128xf32>
    %339 = vector.broadcast %338 : vector<1x8x128xf32> to vector<2x8x128xf32>
    %340 = arith.mulf %335, %339 : vector<2x8x128xf32>
    %341 = arith.mulf %340, %37 : vector<2x8x128xf32>
    %cst_144 = arith.constant dense<0.000000e+00> : vector<2x128xf32>
    %342 = vector.multi_reduction <add>, %341, %cst_144 [1] : vector<2x8x128xf32> to vector<2x128xf32>
    %343 = tpu.concatenate %222, %262, %302, %342 in 0 : vector<2x128xf32>, vector<2x128xf32>, vector<2x128xf32>, vector<2x128xf32> -> vector<8x128xf32>
    %c0_145 = arith.constant 0 : index
    %c0_146 = arith.constant 0 : index
    %344 = vector.load %arg22[%c0_145, %c0_146] : memref<8x128xf32, #tpu.memory_space<vmem>>, vector<8x128xf32>
    tpu.vector_store %arg22[%c0_145, %c0_146], %343 {strides = array<i32>} : memref<8x128xf32, #tpu.memory_space<vmem>>, vector<8x128xf32>,
    return
  }
}

</mosaic_0001>

<llo_original>
// kernel: _lambda_.1
$region0: #{_lambda_.1}
  #allocation0 [shape = 'u32[]', space=smem, size = 0x4, offset = 0x4, fixed_abs, tag = 'smem constant byte address 0x4 - core index']
  #allocation1 [shape = 'u32[144,128]{1,0:T(1,128)}', space=vmem, size = 0x12000, scoped, tag = 'internal scratch']
  %s0 = inlined_call_operand.vmem [shape: f32[112,224], index: 0, kind: input, shape index: {}]
  %s1 = inlined_call_operand.hbm [shape: f32[224,128], index: 1, kind: input, shape index: {}]
  %s2 = inlined_call_operand.vmem [shape: f32[16,112], index: 2, kind: input, shape index: {}]
  %s3 = inlined_call_operand.vmem [shape: f32[16,128], index: 3, kind: input, shape index: {}]
  %s4 = inlined_call_operand.vmem [shape: f32[16,32], index: 4, kind: input, shape index: {}]
  %s5 = inlined_call_operand.vmem [shape: f32[16,16], index: 5, kind: input, shape index: {}]
  %s6 = inlined_call_operand.vmem [shape: f32[32,128], index: 6, kind: input, shape index: {}]
  %s7 = inlined_call_operand.hbm [shape: f32[1,128], index: 7, kind: input, shape index: {}]
  %s8 = inlined_call_operand.hbm [shape: f32[16,16], index: 8, kind: input, shape index: {}]
  %s9 = inlined_call_operand.vmem [shape: f32[16,16], index: 9, kind: input, shape index: {}]
  %s10 = inlined_call_operand.hbm [shape: f32[8,16], index: 10, kind: input, shape index: {}]
  %s11 = inlined_call_operand.vmem [shape: f32[16,8], index: 11, kind: input, shape index: {}]
  %s12 = inlined_call_operand.hbm [shape: f32[128,128], index: 12, kind: input, shape index: {}]
  %s13 = inlined_call_operand.hbm [shape: f32[1,128], index: 13, kind: input, shape index: {}]
  %s14 = inlined_call_operand.vmem [shape: f32[128,8], index: 14, kind: input, shape index: {}]
  %s15 = inlined_call_operand.vmem [shape: f32[128,4], index: 15, kind: input, shape index: {}]
  %s16 = inlined_call_operand.vmem [shape: f32[4,1,1], index: 16, kind: input, shape index: {}]
  %s17 = inlined_call_operand.vmem [shape: f32[4,1,128], index: 17, kind: input, shape index: {}]
  %s18 = inlined_call_operand.vmem [shape: f32[4,1,128], index: 18, kind: input, shape index: {}]
  %s19 = inlined_call_operand.vmem [shape: f32[4,1,1], index: 19, kind: input, shape index: {}]
  %s20 = inlined_call_operand.vmem [shape: f32[4,1,128], index: 20, kind: input, shape index: {}]
  %s21 = inlined_call_operand.vmem [shape: f32[4,1,128], index: 21, kind: input, shape index: {}]
  %s22 = inlined_call_operand.hbm [shape: f32[8,128], index: 22, kind: output, shape index: {}]
  %s23 = sld [smem:[#allocation0]]
  $region122: #{_lambda_.1} parent=0
    _
  %s25 = ssub.s32 1, %s23
  %s26 = scalar_select 0, %s25, %s23
  $region1: #{_lambda_.1} parent=0
    #allocation2 [shape = 'u8[114688]{0}', space=vmem, size = 0x1c000, scoped, tag = 'input window, operand 1, single buffered']
    #allocation3 [shape = 's32[1]{0}', space=sflag, size = 0x4, scoped, tag = 'scoped memory for _lambda_.1']
    #allocation4 [shape = 's32[1]{0}', space=sflag, size = 0x4, scoped, tag = 'scoped memory for _lambda_.1']
    #allocation5 [shape = 'u8[512]{0}', space=vmem, size = 0x400, scoped, tag = 'input window, operand 7, single buffered']
    #allocation6 [shape = 's32[1]{0}', space=sflag, size = 0x4, scoped, tag = 'scoped memory for _lambda_.1']
    #allocation7 [shape = 'u8[8192]{0}', space=vmem, size = 0x2000, scoped, tag = 'input window, operand 8, single buffered']
    #allocation8 [shape = 'u8[4096]{0}', space=vmem, size = 0x1000, scoped, tag = 'input window, operand 10, single buffered']
    #allocation9 [shape = 's32[1]{0}', space=sflag, size = 0x4, scoped, tag = 'scoped memory for _lambda_.1']
    #allocation10 [shape = 'u8[65536]{0}', space=vmem, size = 0x10000, scoped, tag = 'input window, operand 12, single buffered']
    #allocation11 [shape = 'u8[512]{0}', space=vmem, size = 0x400, scoped, tag = 'input window, operand 13, single buffered']
    #allocation12 [shape = 's32[1]{0}', space=sflag, size = 0x4, scoped, tag = 'scoped memory for _lambda_.1']
    #allocation13 [shape = 'u8[4096]{0}', space=vmem, size = 0x1000, scoped, tag = 'output window, operand 0, single buffered']
    %27 = vsyncpa [#allocation3], 0
    %28 = vsyncpa [#allocation6], 0
    %29 = vsyncpa [#allocation9], 0
    %30 = vsyncpa [#allocation12], 0
    %31 = vsyncpa [#allocation4], 0
    // Predicated region
    $region2: #{_lambda_.1} parent=1 // pred_check
      _
    $region3: #{_lambda_.1} parent=1 // pred_check_branch
      %33 = sbr.rel (0) target = $region5
    $region4: #{_lambda_.1} parent=1 // pred_region
      _
    $region5: #{_lambda_.1} parent=1 // pred_fallthru
      _
    // Predicated region
    $region6: #{_lambda_.1} parent=1 // pred_check
      _
    $region7: #{_lambda_.1} parent=1 // pred_check_branch
      %35 = sbr.rel (0) target = $region9
    $region8: #{_lambda_.1} parent=1 // pred_region
      %s37 = ssub.s32 3584, 3584
      %38 = vsyncadd [#allocation3], %s37
      %s39 = sshll.u32 [#allocation2], 4
      %s40 = int_to_ptr.vmem [resolvable:$true] %s39
      %45 = dma.hbm_to_vmem [thread:$0]  %s1, 3584, %s40, [#allocation3], 128, 128, 8
    $region9: #{_lambda_.1} parent=1 // pred_fallthru
      _
    // Predicated region
    $region10: #{_lambda_.1} parent=1 // pred_check
      _
    $region11: #{_lambda_.1} parent=1 // pred_check_branch
      %47 = sbr.rel (0) target = $region13
    $region12: #{_lambda_.1} parent=1 // pred_region
      _
    $region13: #{_lambda_.1} parent=1 // pred_fallthru
      _
    // Predicated region
    $region14: #{_lambda_.1} parent=1 // pred_check
      _
    $region15: #{_lambda_.1} parent=1 // pred_check_branch
      %49 = sbr.rel (0) target = $region17
    $region16: #{_lambda_.1} parent=1 // pred_region
      _
    $region17: #{_lambda_.1} parent=1 // pred_fallthru
      _
    // Predicated region
    $region18: #{_lambda_.1} parent=1 // pred_check
      _
    $region19: #{_lambda_.1} parent=1 // pred_check_branch
      %51 = sbr.rel (0) target = $region21
    $region20: #{_lambda_.1} parent=1 // pred_region
      _
    $region21: #{_lambda_.1} parent=1 // pred_fallthru
      _
    // Predicated region
    $region22: #{_lambda_.1} parent=1 // pred_check
      _
    $region23: #{_lambda_.1} parent=1 // pred_check_branch
      %53 = sbr.rel (0) target = $region25
    $region24: #{_lambda_.1} parent=1 // pred_region
      _
    $region25: #{_lambda_.1} parent=1 // pred_fallthru
      _
    // Predicated region
    $region26: #{_lambda_.1} parent=1 // pred_check
      _
    $region27: #{_lambda_.1} parent=1 // pred_check_branch
      %55 = sbr.rel (0) target = $region29
    $region28: #{_lambda_.1} parent=1 // pred_region
      _
    $region29: #{_lambda_.1} parent=1 // pred_fallthru
      _
    // Predicated region
    $region30: #{_lambda_.1} parent=1 // pred_check
      _
    $region31: #{_lambda_.1} parent=1 // pred_check_branch
      %57 = sbr.rel (0) target = $region33
    $region32: #{_lambda_.1} parent=1 // pred_region
      %s59 = ssub.s32 16, 16
      %60 = vsyncadd [#allocation6], %s59
      %s62 = sshll.u32 [#allocation5], 4
      %s63 = int_to_ptr.vmem [resolvable:$true] %s62
      %65 = dma.hbm_to_vmem [thread:$0]  %s7, 16, %s63, [#allocation6]
    $region33: #{_lambda_.1} parent=1 // pred_fallthru
      _
    // Predicated region
    $region34: #{_lambda_.1} parent=1 // pred_check
      _
    $region35: #{_lambda_.1} parent=1 // pred_check_branch
      %67 = sbr.rel (0) target = $region37
    $region36: #{_lambda_.1} parent=1 // pred_region
      %s69 = ssub.s32 256, 256
      %70 = vsyncadd [#allocation6], %s69
      %s71 = sshll.u32 [#allocation7], 4
      %s72 = int_to_ptr.vmem [resolvable:$true] %s71
      %77 = dma.hbm_to_vmem [thread:$0]  %s8, 256, %s72, [#allocation6], 128, 128, 8
    $region37: #{_lambda_.1} parent=1 // pred_fallthru
      _
    // Predicated region
    $region38: #{_lambda_.1} parent=1 // pred_check
      _
    $region39: #{_lambda_.1} parent=1 // pred_check_branch
      %79 = sbr.rel (0) target = $region41
    $region40: #{_lambda_.1} parent=1 // pred_region
      _
    $region41: #{_lambda_.1} parent=1 // pred_fallthru
      _
    // Predicated region
    $region42: #{_lambda_.1} parent=1 // pred_check
      _
    $region43: #{_lambda_.1} parent=1 // pred_check_branch
      %81 = sbr.rel (0) target = $region45
    $region44: #{_lambda_.1} parent=1 // pred_region
      %s83 = ssub.s32 128, 128
      %84 = vsyncadd [#allocation9], %s83
      %s86 = sshll.u32 [#allocation8], 4
      %s87 = int_to_ptr.vmem [resolvable:$true] %s86
      %89 = dma.hbm_to_vmem [thread:$0]  %s10, 128, %s87, [#allocation9]
    $region45: #{_lambda_.1} parent=1 // pred_fallthru
      _
    // Predicated region
    $region46: #{_lambda_.1} parent=1 // pred_check
      _
    $region47: #{_lambda_.1} parent=1 // pred_check_branch
      %91 = sbr.rel (0) target = $region49
    $region48: #{_lambda_.1} parent=1 // pred_region
      _
    $region49: #{_lambda_.1} parent=1 // pred_fallthru
      _
    // Predicated region
    $region50: #{_lambda_.1} parent=1 // pred_check
      _
    $region51: #{_lambda_.1} parent=1 // pred_check_branch
      %93 = sbr.rel (0) target = $region53
    $region52: #{_lambda_.1} parent=1 // pred_region
      %s95 = ssub.s32 2048, 2048
      %96 = vsyncadd [#allocation9], %s95
      %s97 = sshll.u32 [#allocation10], 4
      %s98 = int_to_ptr.vmem [resolvable:$true] %s97
      %103 = dma.hbm_to_vmem [thread:$0]  %s12, 2048, %s98, [#allocation9], 128, 128, 8
    $region53: #{_lambda_.1} parent=1 // pred_fallthru
      _
    // Predicated region
    $region54: #{_lambda_.1} parent=1 // pred_check
      _
    $region55: #{_lambda_.1} parent=1 // pred_check_branch
      %105 = sbr.rel (0) target = $region57
    $region56: #{_lambda_.1} parent=1 // pred_region
      %s107 = ssub.s32 16, 16
      %108 = vsyncadd [#allocation12], %s107
      %s110 = sshll.u32 [#allocation11], 4
      %s111 = int_to_ptr.vmem [resolvable:$true] %s110
      %113 = dma.hbm_to_vmem [thread:$0]  %s13, 16, %s111, [#allocation12]
    $region57: #{_lambda_.1} parent=1 // pred_fallthru
      _
    // Predicated region
    $region58: #{_lambda_.1} parent=1 // pred_check
      _
    $region59: #{_lambda_.1} parent=1 // pred_check_branch
      %115 = sbr.rel (0) target = $region61
    $region60: #{_lambda_.1} parent=1 // pred_region
      _
    $region61: #{_lambda_.1} parent=1 // pred_fallthru
      _
    // Predicated region
    $region62: #{_lambda_.1} parent=1 // pred_check
      _
    $region63: #{_lambda_.1} parent=1 // pred_check_branch
      %117 = sbr.rel (0) target = $region65
    $region64: #{_lambda_.1} parent=1 // pred_region
      _
    $region65: #{_lambda_.1} parent=1 // pred_fallthru
      _
    // Predicated region
    $region66: #{_lambda_.1} parent=1 // pred_check
      _
    $region67: #{_lambda_.1} parent=1 // pred_check_branch
      %119 = sbr.rel (0) target = $region69
    $region68: #{_lambda_.1} parent=1 // pred_region
      _
    $region69: #{_lambda_.1} parent=1 // pred_fallthru
      _
    // Predicated region
    $region70: #{_lambda_.1} parent=1 // pred_check
      _
    $region71: #{_lambda_.1} parent=1 // pred_check_branch
      %121 = sbr.rel (0) target = $region73
    $region72: #{_lambda_.1} parent=1 // pred_region
      _
    $region73: #{_lambda_.1} parent=1 // pred_fallthru
      _
    // Predicated region
    $region74: #{_lambda_.1} parent=1 // pred_check
      _
    $region75: #{_lambda_.1} parent=1 // pred_check_branch
      %123 = sbr.rel (0) target = $region77
    $region76: #{_lambda_.1} parent=1 // pred_region
      _
    $region77: #{_lambda_.1} parent=1 // pred_fallthru
      _
    // Predicated region
    $region78: #{_lambda_.1} parent=1 // pred_check
      _
    $region79: #{_lambda_.1} parent=1 // pred_check_branch
      %125 = sbr.rel (0) target = $region81
    $region80: #{_lambda_.1} parent=1 // pred_region
      _
    $region81: #{_lambda_.1} parent=1 // pred_fallthru
      _
    // Predicated region
    $region82: #{_lambda_.1} parent=1 // pred_check
      _
    $region83: #{_lambda_.1} parent=1 // pred_check_branch
      %127 = sbr.rel (0) target = $region85
    $region84: #{_lambda_.1} parent=1 // pred_region
      _
    $region85: #{_lambda_.1} parent=1 // pred_fallthru
      _
    // Predicated region
    $region86: #{_lambda_.1} parent=1 // pred_check
      _
    $region87: #{_lambda_.1} parent=1 // pred_check_branch
      %129 = sbr.rel (0) target = $region89
    $region88: #{_lambda_.1} parent=1 // pred_region
      _
    $region89: #{_lambda_.1} parent=1 // pred_fallthru
      _
    // Predicated region
    $region90: #{_lambda_.1} parent=1 // pred_check
      _
    $region91: #{_lambda_.1} parent=1 // pred_check_branch
      %131 = sbr.rel (0) target = $region93
    $region92: #{_lambda_.1} parent=1 // pred_region
      %132 = dma.done [#allocation3], 3584
    $region93: #{_lambda_.1} parent=1 // pred_fallthru
      _
    // Predicated region
    $region94: #{_lambda_.1} parent=1 // pred_check
      _
    $region95: #{_lambda_.1} parent=1 // pred_check_branch
      %134 = sbr.rel (0) target = $region97
    $region96: #{_lambda_.1} parent=1 // pred_region
      %135 = dma.done [#allocation6], 16
    $region97: #{_lambda_.1} parent=1 // pred_fallthru
      _
    // Predicated region
    $region98: #{_lambda_.1} parent=1 // pred_check
      _
    $region99: #{_lambda_.1} parent=1 // pred_check_branch
      %137 = sbr.rel (0) target = $region101
    $region100: #{_lambda_.1} parent=1 // pred_region
      %138 = dma.done [#allocation6], 256
    $region101: #{_lambda_.1} parent=1 // pred_fallthru
      _
    // Predicated region
    $region102: #{_lambda_.1} parent=1 // pred_check
      _
    $region103: #{_lambda_.1} parent=1 // pred_check_branch
      %140 = sbr.rel (0) target = $region105
    $region104: #{_lambda_.1} parent=1 // pred_region
      %141 = dma.done [#allocation9], 128
    $region105: #{_lambda_.1} parent=1 // pred_fallthru
      _
    // Predicated region
    $region106: #{_lambda_.1} parent=1 // pred_check
      _
    $region107: #{_lambda_.1} parent=1 // pred_check_branch
      %143 = sbr.rel (0) target = $region109
    $region108: #{_lambda_.1} parent=1 // pred_region
      %144 = dma.done [#allocation9], 2048
    $region109: #{_lambda_.1} parent=1 // pred_fallthru
      _
    // Predicated region
    $region110: #{_lambda_.1} parent=1 // pred_check
      _
    $region111: #{_lambda_.1} parent=1 // pred_check_branch
      %146 = sbr.rel (0) target = $region113
    $region112: #{_lambda_.1} parent=1 // pred_region
      %147 = dma.done [#allocation12], 16
    $region113: #{_lambda_.1} parent=1 // pred_fallthru
      _
    %v148 = vld [vmem:[%s0] sm:$0xff]
    %v149 = vld [vmem:[%s0 + $0x8] sm:$0xff]
    %v150 = vld [vmem:[%s0 + $0x10] sm:$0xff]
    %v151 = vld [vmem:[%s0 + $0x18] sm:$0xff]
    %v152 = vld [vmem:[%s0 + $0x20] sm:$0xff]
    %v153 = vld [vmem:[%s0 + $0x28] sm:$0xff]
    %v154 = vld [vmem:[%s0 + $0x30] sm:$0xff]
    %v155 = vld [vmem:[%s0 + $0x38] sm:$0xff]
    %v156 = vld [vmem:[%s0 + $0x40] sm:$0xff]
    %v157 = vld [vmem:[%s0 + $0x48] sm:$0xff]
    %v158 = vld [vmem:[%s0 + $0x50] sm:$0xff]
    %v159 = vld [vmem:[%s0 + $0x58] sm:$0xff]
    %v160 = vld [vmem:[%s0 + $0x60] sm:$0xff]
    %v161 = vld [vmem:[%s0 + $0x68] sm:$0xff]
    %v162 = vld [vmem:[%s0 + $0x70] sm:$0xff]
    %v163 = vld [vmem:[%s0 + $0x78] sm:$0xff]
    %v164 = vld [vmem:[%s0 + $0x80] sm:$0xff]
    %v165 = vld [vmem:[%s0 + $0x88] sm:$0xff]
    %v166 = vld [vmem:[%s0 + $0x90] sm:$0xff]
    %v167 = vld [vmem:[%s0 + $0x98] sm:$0xff]
    %v168 = vld [vmem:[%s0 + $0xa0] sm:$0xff]
    %v169 = vld [vmem:[%s0 + $0xa8] sm:$0xff]
    %v170 = vld [vmem:[%s0 + $0xb0] sm:$0xff]
    %v171 = vld [vmem:[%s0 + $0xb8] sm:$0xff]
    %v172 = vld [vmem:[%s0 + $0xc0] sm:$0xff]
    %v173 = vld [vmem:[%s0 + $0xc8] sm:$0xff]
    %v174 = vld [vmem:[%s0 + $0xd0] sm:$0xff]
    %v175 = vld [vmem:[%s0 + $0xd8] sm:$0xff]
    %v176 = vld [vmem:[#allocation2] sm:$0xff]
    %v177 = vld [vmem:[#allocation2 + $0x8] sm:$0xff]
    %v178 = vld [vmem:[#allocation2 + $0x10] sm:$0xff]
    %v179 = vld [vmem:[#allocation2 + $0x18] sm:$0xff]
    %v180 = vld [vmem:[#allocation2 + $0x20] sm:$0xff]
    %v181 = vld [vmem:[#allocation2 + $0x28] sm:$0xff]
    %v182 = vld [vmem:[#allocation2 + $0x30] sm:$0xff]
    %v183 = vld [vmem:[#allocation2 + $0x38] sm:$0xff]
    %v184 = vld [vmem:[#allocation2 + $0x40] sm:$0xff]
    %v185 = vld [vmem:[#allocation2 + $0x48] sm:$0xff]
    %v186 = vld [vmem:[#allocation2 + $0x50] sm:$0xff]
    %v187 = vld [vmem:[#allocation2 + $0x58] sm:$0xff]
    %v188 = vld [vmem:[#allocation2 + $0x60] sm:$0xff]
    %v189 = vld [vmem:[#allocation2 + $0x68] sm:$0xff]
    %v190 = vld [vmem:[#allocation2 + $0x70] sm:$0xff]
    %v191 = vld [vmem:[#allocation2 + $0x78] sm:$0xff]
    %v192 = vld [vmem:[#allocation2 + $0x80] sm:$0xff]
    %v193 = vld [vmem:[#allocation2 + $0x88] sm:$0xff]
    %v194 = vld [vmem:[#allocation2 + $0x90] sm:$0xff]
    %v195 = vld [vmem:[#allocation2 + $0x98] sm:$0xff]
    %v196 = vld [vmem:[#allocation2 + $0xa0] sm:$0xff]
    %v197 = vld [vmem:[#allocation2 + $0xa8] sm:$0xff]
    %v198 = vld [vmem:[#allocation2 + $0xb0] sm:$0xff]
    %v199 = vld [vmem:[#allocation2 + $0xb8] sm:$0xff]
    %v200 = vld [vmem:[#allocation2 + $0xc0] sm:$0xff]
    %v201 = vld [vmem:[#allocation2 + $0xc8] sm:$0xff]
    %v202 = vld [vmem:[#allocation2 + $0xd0] sm:$0xff]
    %v203 = vld [vmem:[#allocation2 + $0xd8] sm:$0xff]
    %vm204 = vcmask 785408
    %v206 = vsel %vm204, %v149, 0
    %v209 = vsel %vm204, %v151, 0
    %v212 = vsel %vm204, %v153, 0
    %v215 = vsel %vm204, %v155, 0
    %v218 = vsel %vm204, %v157, 0
    %v221 = vsel %vm204, %v159, 0
    %v224 = vsel %vm204, %v161, 0
    %v227 = vsel %vm204, %v163, 0
    %v230 = vsel %vm204, %v165, 0
    %v233 = vsel %vm204, %v167, 0
    %v236 = vsel %vm204, %v169, 0
    %v239 = vsel %vm204, %v171, 0
    %v242 = vsel %vm204, %v173, 0
    %v245 = vsel %vm204, %v175, 0
    %247 = vmatprep.subr.mxu0 0.0
    %248 = vmatpush1.msra.mxu0 %v176
    %249 = vmatprep.subr.mxu0 0.0
    %250 = vmatpush1.msra.mxu0 %v177
    %251 = vmatprep.subr.mxu0 0.0
    %252 = vmatpush1.msra.mxu0 %v178
    %253 = vmatprep.subr.mxu0 0.0
    %254 = vmatpush1.msra.mxu0 %v179
    %255 = vmatprep.subr.mxu0 0.0
    %256 = vmatpush1.msra.mxu0 %v180
    %257 = vmatprep.subr.mxu0 0.0
    %258 = vmatpush1.msra.mxu0 %v181
    %259 = vmatprep.subr.mxu0 0.0
    %260 = vmatpush1.msra.mxu0 %v182
    %261 = vmatprep.subr.mxu0 0.0
    %262 = vmatpush1.msra.mxu0 %v183
    %263 = vmatprep.subr.mxu0 0.0
    %264 = vmatpush1.msra.mxu0 %v184
    %265 = vmatprep.subr.mxu0 0.0
    %266 = vmatpush1.msra.mxu0 %v185
    %267 = vmatprep.subr.mxu0 0.0
    %268 = vmatpush1.msra.mxu0 %v186
    %269 = vmatprep.subr.mxu0 0.0
    %270 = vmatpush1.msra.mxu0 %v187
    %271 = vmatprep.subr.mxu0 0.0
    %272 = vmatpush1.msra.mxu0 %v188
    %273 = vmatprep.subr.mxu0 0.0
    %274 = vmatpush1.msra.mxu0 %v189
    %275 = vmatprep.subr.mxu0 0.0
    %276 = vmatpush1.msra.mxu0 %v190
    %277 = vmatprep.subr.mxu0 0.0
    %278 = vmatpush1.msra.mxu0 %v191
    %279 = vmatprep.subr.mxu0 0.0
    %280 = vmatpush1.msra.mxu0 %v192
    %281 = vmatprep.subr.mxu0 0.0
    %282 = vmatpush1.msra.mxu0 %v193
    %283 = vmatprep.subr.mxu0 0.0
    %284 = vmatpush1.msra.mxu0 %v194
    %285 = vmatprep.subr.mxu0 0.0
    %286 = vmatpush1.msra.mxu0 %v195
    %287 = vmatprep.subr.mxu0 0.0
    %288 = vmatpush1.msra.mxu0 %v196
    %289 = vmatprep.subr.mxu0 0.0
    %290 = vmatpush1.msra.mxu0 %v197
    %291 = vmatprep.subr.mxu0 0.0
    %292 = vmatpush1.msra.mxu0 %v198
    %293 = vmatprep.subr.mxu0 0.0
    %294 = vmatpush1.msra.mxu0 %v199
    %295 = vmatprep.subr.mxu0 0.0
    %296 = vmatpush1.msra.mxu0 %v200
    %297 = vmatprep.subr.mxu0 0.0
    %298 = vmatpush1.msra.mxu0 %v201
    %299 = vmatprep.subr.mxu0 0.0
    %300 = vmatpush1.msra.mxu0 %v202
    %301 = vmatprep.subr.mxu0 0.0
    %302 = vmatpush1.msra.mxu0 %v203
    %303 = vmatprep.subr.mxu0 0.0
    %304 = vmatpush1.msra.mxu0 0.0
    %305 = vmatprep.subr.mxu0 0.0
    %306 = vmatpush1.msra.mxu0 0.0
    %307 = vmatprep.subr.mxu0 0.0
    %308 = vmatpush1.msra.mxu0 0.0
    %309 = vmatprep.subr.mxu0 0.0
    %310 = vmatpush1.msra.mxu0 0.0
    %311 = vmatprep.mubr.f32.mxu0 %v206
    %312 = vmatmul.mubr.f32.gmra.mrb[0].mxu0 %v148
    %v313 = vpop.f32.mrb[0].mxu0
    %v314 = vadd.f32 0.0, %v313
    %v315 = vpop.f32.mrb[0].mxu0
    %316 = vmatprep.mubr.f32.mxu0 %v209
    %317 = vmatmul.mubr.f32.gmra.mrb[0].mxu0 %v150
    %v318 = vpop.f32.mrb[0].mxu0
    %v319 = vadd.f32 0.0, %v318
    %v320 = vpop.f32.mrb[0].mxu0
    %321 = vmatprep.mubr.f32.mxu0 %v212
    %322 = vmatmul.mubr.f32.gmra.mrb[0].mxu0 %v152
    %v323 = vpop.f32.mrb[0].mxu0
    %v324 = vadd.f32 0.0, %v323
    %v325 = vpop.f32.mrb[0].mxu0
    %326 = vmatprep.mubr.f32.mxu0 %v215
    %327 = vmatmul.mubr.f32.gmra.mrb[0].mxu0 %v154
    %v328 = vpop.f32.mrb[0].mxu0
    %v329 = vadd.f32 0.0, %v328
    %v330 = vpop.f32.mrb[0].mxu0
    %331 = vmatprep.mubr.f32.mxu0 %v218
    %332 = vmatmul.mubr.f32.gmra.mrb[0].mxu0 %v156
    %v333 = vpop.f32.mrb[0].mxu0
    %v334 = vadd.f32 0.0, %v333
    %v335 = vpop.f32.mrb[0].mxu0
    %336 = vmatprep.mubr.f32.mxu0 %v221
    %337 = vmatmul.mubr.f32.gmra.mrb[0].mxu0 %v158
    %v338 = vpop.f32.mrb[0].mxu0
    %v339 = vadd.f32 0.0, %v338
    %v340 = vpop.f32.mrb[0].mxu0
    %341 = vmatprep.mubr.f32.mxu0 %v224
    %342 = vmatmul.mubr.f32.gmra.mrb[0].mxu0 %v160
    %v343 = vpop.f32.mrb[0].mxu0
    %v344 = vadd.f32 0.0, %v343
    %v345 = vpop.f32.mrb[0].mxu0
    %346 = vmatprep.mubr.f32.mxu0 %v227
    %347 = vmatmul.mubr.f32.gmra.mrb[0].mxu0 %v162
    %v348 = vpop.f32.mrb[0].mxu0
    %v349 = vadd.f32 0.0, %v348
    %v350 = vpop.f32.mrb[0].mxu0
    %351 = vmatprep.mubr.f32.mxu0 %v230
    %352 = vmatmul.mubr.f32.gmra.mrb[0].mxu0 %v164
    %v353 = vpop.f32.mrb[0].mxu0
    %v354 = vadd.f32 0.0, %v353
    %v355 = vpop.f32.mrb[0].mxu0
    %356 = vmatprep.mubr.f32.mxu0 %v233
    %357 = vmatmul.mubr.f32.gmra.mrb[0].mxu0 %v166
    %v358 = vpop.f32.mrb[0].mxu0
    %v359 = vadd.f32 0.0, %v358
    %v360 = vpop.f32.mrb[0].mxu0
    %361 = vmatprep.mubr.f32.mxu0 %v236
    %362 = vmatmul.mubr.f32.gmra.mrb[0].mxu0 %v168
    %v363 = vpop.f32.mrb[0].mxu0
    %v364 = vadd.f32 0.0, %v363
    %v365 = vpop.f32.mrb[0].mxu0
    %366 = vmatprep.mubr.f32.mxu0 %v239
    %367 = vmatmul.mubr.f32.gmra.mrb[0].mxu0 %v170
    %v368 = vpop.f32.mrb[0].mxu0
    %v369 = vadd.f32 0.0, %v368
    %v370 = vpop.f32.mrb[0].mxu0
    %371 = vmatprep.mubr.f32.mxu0 %v242
    %372 = vmatmul.mubr.f32.gmra.mrb[0].mxu0 %v172
    %v373 = vpop.f32.mrb[0].mxu0
    %v374 = vadd.f32 0.0, %v373
    %v375 = vpop.f32.mrb[0].mxu0
    %376 = vmatprep.mubr.f32.mxu0 %v245
    %377 = vmatmul.mubr.f32.gmra.mrb[0].mxu0 %v174
    %v378 = vpop.f32.mrb[0].mxu0
    %v379 = vadd.f32 0.0, %v378
    %v380 = vpop.f32.mrb[0].mxu0
    %381 = vdwg.mxu0
    %v382 = vld [vmem:[%s2] sm:$0xff]
    %v383 = vld [vmem:[%s2 + $0x8] sm:$0xff]
    %v384 = vld [vmem:[%s3] sm:$0xff]
    %v385 = vld [vmem:[%s3 + $0x8] sm:$0xff]
    %vm386 = vcmask 916480
    %v388 = vsel %vm386, %v382, 0
    %v391 = vsel %vm386, %v383, 0
    %393 = vmatprep.subr.mxu0 0.0
    %394 = vmatpush1.msra.mxu0 %v314
    %395 = vmatprep.subr.mxu0 0.0
    %396 = vmatpush1.msra.mxu0 %v319
    %397 = vmatprep.subr.mxu0 0.0
    %398 = vmatpush1.msra.mxu0 %v324
    %399 = vmatprep.subr.mxu0 0.0
    %400 = vmatpush1.msra.mxu0 %v329
    %401 = vmatprep.subr.mxu0 0.0
    %402 = vmatpush1.msra.mxu0 %v334
    %403 = vmatprep.subr.mxu0 0.0
    %404 = vmatpush1.msra.mxu0 %v339
    %405 = vmatprep.subr.mxu0 0.0
    %406 = vmatpush1.msra.mxu0 %v344
    %407 = vmatprep.subr.mxu0 0.0
    %408 = vmatpush1.msra.mxu0 %v349
    %409 = vmatprep.subr.mxu0 0.0
    %410 = vmatpush1.msra.mxu0 %v354
    %411 = vmatprep.subr.mxu0 0.0
    %412 = vmatpush1.msra.mxu0 %v359
    %413 = vmatprep.subr.mxu0 0.0
    %414 = vmatpush1.msra.mxu0 %v364
    %415 = vmatprep.subr.mxu0 0.0
    %416 = vmatpush1.msra.mxu0 %v369
    %417 = vmatprep.subr.mxu0 0.0
    %418 = vmatpush1.msra.mxu0 %v374
    %419 = vmatprep.subr.mxu0 0.0
    %420 = vmatpush1.msra.mxu0 %v379
    %421 = vmatprep.subr.mxu0 0.0
    %422 = vmatpush1.msra.mxu0 0.0
    %423 = vmatprep.subr.mxu0 0.0
    %424 = vmatpush1.msra.mxu0 0.0
    %425 = vmatprep.subr.mxu0 0.0
    %426 = vmatpush1.msra.mxu0 0.0
    %427 = vmatprep.subr.mxu0 0.0
    %428 = vmatpush1.msra.mxu0 0.0
    %429 = vmatprep.subr.mxu0 0.0
    %430 = vmatpush1.msra.mxu0 0.0
    %431 = vmatprep.subr.mxu0 0.0
    %432 = vmatpush1.msra.mxu0 0.0
    %433 = vmatprep.subr.mxu0 0.0
    %434 = vmatpush1.msra.mxu0 0.0
    %435 = vmatprep.subr.mxu0 0.0
    %436 = vmatpush1.msra.mxu0 0.0
    %437 = vmatprep.subr.mxu0 0.0
    %438 = vmatpush1.msra.mxu0 0.0
    %439 = vmatprep.subr.mxu0 0.0
    %440 = vmatpush1.msra.mxu0 0.0
    %441 = vmatprep.subr.mxu0 0.0
    %442 = vmatpush1.msra.mxu0 0.0
    %443 = vmatprep.subr.mxu0 0.0
    %444 = vmatpush1.msra.mxu0 0.0
    %445 = vmatprep.subr.mxu0 0.0
    %446 = vmatpush1.msra.mxu0 0.0
    %447 = vmatprep.subr.mxu0 0.0
    %448 = vmatpush1.msra.mxu0 0.0
    %449 = vmatprep.subr.mxu0 0.0
    %450 = vmatpush1.msra.mxu0 0.0
    %451 = vmatprep.subr.mxu0 0.0
    %452 = vmatpush1.msra.mxu0 0.0
    %453 = vmatprep.subr.mxu0 0.0
    %454 = vmatpush1.msra.mxu0 0.0
    %455 = vmatprep.subr.mxu0 0.0
    %456 = vmatpush1.msra.mxu0 0.0
    %457 = vmatprep.mubr.f32.mxu0 0.0
    %458 = vmatmul.mubr.f32.gmra.mrb[0].mxu0 %v388
    %v459 = vpop.f32.mrb[0].mxu0
    %v460 = vadd.f32 %v384, %v459
    %v461 = vpop.f32.mrb[0].mxu0
    %462 = vmatprep.mubr.f32.mxu0 0.0
    %463 = vmatmul.mubr.f32.gmra.mrb[0].mxu0 %v391
    %v464 = vpop.f32.mrb[0].mxu0
    %v465 = vadd.f32 %v385, %v464
    %v466 = vpop.f32.mrb[0].mxu0
    %467 = vdwg.mxu0
    %vm468 = vcmp.ge.f32.partialorder %v460, 0.0
    %vm469 = vcmp.ge.f32.partialorder %v465, 0.0
    %v470 = vmul.f32 %v460, 0.2
    %v471 = vmul.f32 %v465, 0.2
    %v472 = vsel %vm468, %v460, %v470
    %v473 = vsel %vm469, %v465, %v471
    %v474 = vld [vmem:[%s4] sm:$0xff]
    %v475 = vld [vmem:[%s4 + $0x8] sm:$0xff]
    %v476 = vld [vmem:[%s6] sm:$0xff]
    %v477 = vld [vmem:[%s6 + $0x8] sm:$0xff]
    %v478 = vld [vmem:[%s6 + $0x10] sm:$0xff]
    %v479 = vld [vmem:[%s6 + $0x18] sm:$0xff]
    %vm480 = vcmask 261120
    %v482 = vsel %vm480, %v474, 0
    %v485 = vsel %vm480, %v475, 0
    %487 = vmatprep.subr.mxu0 0.0
    %488 = vmatpush1.msra.mxu0 %v476
    %489 = vmatprep.subr.mxu0 0.0
    %490 = vmatpush1.msra.mxu0 %v477
    %491 = vmatprep.subr.mxu0 0.0
    %492 = vmatpush1.msra.mxu0 %v478
    %493 = vmatprep.subr.mxu0 0.0
    %494 = vmatpush1.msra.mxu0 %v479
    %495 = vmatprep.subr.mxu0 0.0
    %496 = vmatpush1.msra.mxu0 0.0
    %497 = vmatprep.subr.mxu0 0.0
    %498 = vmatpush1.msra.mxu0 0.0
    %499 = vmatprep.subr.mxu0 0.0
    %500 = vmatpush1.msra.mxu0 0.0
    %501 = vmatprep.subr.mxu0 0.0
    %502 = vmatpush1.msra.mxu0 0.0
    %503 = vmatprep.subr.mxu0 0.0
    %504 = vmatpush1.msra.mxu0 0.0
    %505 = vmatprep.subr.mxu0 0.0
    %506 = vmatpush1.msra.mxu0 0.0
    %507 = vmatprep.subr.mxu0 0.0
    %508 = vmatpush1.msra.mxu0 0.0
    %509 = vmatprep.subr.mxu0 0.0
    %510 = vmatpush1.msra.mxu0 0.0
    %511 = vmatprep.subr.mxu0 0.0
    %512 = vmatpush1.msra.mxu0 0.0
    %513 = vmatprep.subr.mxu0 0.0
    %514 = vmatpush1.msra.mxu0 0.0
    %515 = vmatprep.subr.mxu0 0.0
    %516 = vmatpush1.msra.mxu0 0.0
    %517 = vmatprep.subr.mxu0 0.0
    %518 = vmatpush1.msra.mxu0 0.0
    %519 = vmatprep.subr.mxu0 0.0
    %520 = vmatpush1.msra.mxu0 0.0
    %521 = vmatprep.subr.mxu0 0.0
    %522 = vmatpush1.msra.mxu0 0.0
    %523 = vmatprep.subr.mxu0 0.0
    %524 = vmatpush1.msra.mxu0 0.0
    %525 = vmatprep.subr.mxu0 0.0
    %526 = vmatpush1.msra.mxu0 0.0
    %527 = vmatprep.subr.mxu0 0.0
    %528 = vmatpush1.msra.mxu0 0.0
    %529 = vmatprep.subr.mxu0 0.0
    %530 = vmatpush1.msra.mxu0 0.0
    %531 = vmatprep.subr.mxu0 0.0
    %532 = vmatpush1.msra.mxu0 0.0
    %533 = vmatprep.subr.mxu0 0.0
    %534 = vmatpush1.msra.mxu0 0.0
    %535 = vmatprep.subr.mxu0 0.0
    %536 = vmatpush1.msra.mxu0 0.0
    %537 = vmatprep.subr.mxu0 0.0
    %538 = vmatpush1.msra.mxu0 0.0
    %539 = vmatprep.subr.mxu0 0.0
    %540 = vmatpush1.msra.mxu0 0.0
    %541 = vmatprep.subr.mxu0 0.0
    %542 = vmatpush1.msra.mxu0 0.0
    %543 = vmatprep.subr.mxu0 0.0
    %544 = vmatpush1.msra.mxu0 0.0
    %545 = vmatprep.subr.mxu0 0.0
    %546 = vmatpush1.msra.mxu0 0.0
    %547 = vmatprep.subr.mxu0 0.0
    %548 = vmatpush1.msra.mxu0 0.0
    %549 = vmatprep.subr.mxu0 0.0
    %550 = vmatpush1.msra.mxu0 0.0
    %551 = vmatprep.mubr.f32.mxu0 0.0
    %552 = vmatmul.mubr.f32.gmra.mrb[0].mxu0 %v482
    %v553 = vpop.f32.mrb[0].mxu0
    %v554 = vadd.f32 0.0, %v553
    %v555 = vpop.f32.mrb[0].mxu0
    %556 = vmatprep.mubr.f32.mxu0 0.0
    %557 = vmatmul.mubr.f32.gmra.mrb[0].mxu0 %v485
    %v558 = vpop.f32.mrb[0].mxu0
    %v559 = vadd.f32 0.0, %v558
    %v560 = vpop.f32.mrb[0].mxu0
    %561 = vdwg.mxu0
    %v562 = vld [vmem:[%s5] sm:$0xff]
    %v563 = vld [vmem:[%s5 + $0x8] sm:$0xff]
    %v564 = vld [vmem:[#allocation5] sm:$0x1]
    %v566 = vlaneseq
    %v567 = vshrl.u32 %v566, 7
    %v568 = vsub.s32 0, %v567
    %v569 = vrot.slane %v564, %v568
    %vm571 = vcmask 130048
    %v573 = vsel %vm571, %v562, 0
    %v576 = vsel %vm571, %v563, 0
    %578 = vmatprep.subr.mxu0 0.0
    %579 = vmatpush1.msra.mxu0 %v554
    %580 = vmatprep.subr.mxu0 0.0
    %581 = vmatpush1.msra.mxu0 %v559
    %582 = vmatprep.subr.mxu0 0.0
    %583 = vmatpush1.msra.mxu0 0.0
    %584 = vmatprep.subr.mxu0 0.0
    %585 = vmatpush1.msra.mxu0 0.0
    %586 = vmatprep.subr.mxu0 0.0
    %587 = vmatpush1.msra.mxu0 0.0
    %588 = vmatprep.subr.mxu0 0.0
    %589 = vmatpush1.msra.mxu0 0.0
    %590 = vmatprep.subr.mxu0 0.0
    %591 = vmatpush1.msra.mxu0 0.0
    %592 = vmatprep.subr.mxu0 0.0
    %593 = vmatpush1.msra.mxu0 0.0
    %594 = vmatprep.subr.mxu0 0.0
    %595 = vmatpush1.msra.mxu0 0.0
    %596 = vmatprep.subr.mxu0 0.0
    %597 = vmatpush1.msra.mxu0 0.0
    %598 = vmatprep.subr.mxu0 0.0
    %599 = vmatpush1.msra.mxu0 0.0
    %600 = vmatprep.subr.mxu0 0.0
    %601 = vmatpush1.msra.mxu0 0.0
    %602 = vmatprep.subr.mxu0 0.0
    %603 = vmatpush1.msra.mxu0 0.0
    %604 = vmatprep.subr.mxu0 0.0
    %605 = vmatpush1.msra.mxu0 0.0
    %606 = vmatprep.subr.mxu0 0.0
    %607 = vmatpush1.msra.mxu0 0.0
    %608 = vmatprep.subr.mxu0 0.0
    %609 = vmatpush1.msra.mxu0 0.0
    %610 = vmatprep.subr.mxu0 0.0
    %611 = vmatpush1.msra.mxu0 0.0
    %612 = vmatprep.subr.mxu0 0.0
    %613 = vmatpush1.msra.mxu0 0.0
    %614 = vmatprep.subr.mxu0 0.0
    %615 = vmatpush1.msra.mxu0 0.0
    %616 = vmatprep.subr.mxu0 0.0
    %617 = vmatpush1.msra.mxu0 0.0
    %618 = vmatprep.subr.mxu0 0.0
    %619 = vmatpush1.msra.mxu0 0.0
    %620 = vmatprep.subr.mxu0 0.0
    %621 = vmatpush1.msra.mxu0 0.0
    %622 = vmatprep.subr.mxu0 0.0
    %623 = vmatpush1.msra.mxu0 0.0
    %624 = vmatprep.subr.mxu0 0.0
    %625 = vmatpush1.msra.mxu0 0.0
    %626 = vmatprep.subr.mxu0 0.0
    %627 = vmatpush1.msra.mxu0 0.0
    %628 = vmatprep.subr.mxu0 0.0
    %629 = vmatpush1.msra.mxu0 0.0
    %630 = vmatprep.subr.mxu0 0.0
    %631 = vmatpush1.msra.mxu0 0.0
    %632 = vmatprep.subr.mxu0 0.0
    %633 = vmatpush1.msra.mxu0 0.0
    %634 = vmatprep.subr.mxu0 0.0
    %635 = vmatpush1.msra.mxu0 0.0
    %636 = vmatprep.subr.mxu0 0.0
    %637 = vmatpush1.msra.mxu0 0.0
    %638 = vmatprep.subr.mxu0 0.0
    %639 = vmatpush1.msra.mxu0 0.0
    %640 = vmatprep.subr.mxu0 0.0
    %641 = vmatpush1.msra.mxu0 0.0
    %642 = vmatprep.mubr.f32.mxu0 0.0
    %643 = vmatmul.mubr.f32.gmra.mrb[0].mxu0 %v573
    %v644 = vpop.f32.mrb[0].mxu0
    %v645 = vadd.f32 %v569, %v644
    %v646 = vpop.f32.mrb[0].mxu0
    %647 = vmatprep.mubr.f32.mxu0 0.0
    %648 = vmatmul.mubr.f32.gmra.mrb[0].mxu0 %v576
    %v649 = vpop.f32.mrb[0].mxu0
    %v650 = vadd.f32 %v569, %v649
    %v651 = vpop.f32.mrb[0].mxu0
    %652 = vdwg.mxu0
    %v653 = vld [vmem:[#allocation8] sm:$0xff]
    %v655 = vsel %vm571, %v653, 0
    %657 = vmatprep.subr.mxu0 0.0
    %658 = vmatpush1.msra.mxu0 %v472
    %659 = vmatprep.subr.mxu0 0.0
    %660 = vmatpush1.msra.mxu0 %v473
    %661 = vmatprep.subr.mxu0 0.0
    %662 = vmatpush1.msra.mxu0 0.0
    %663 = vmatprep.subr.mxu0 0.0
    %664 = vmatpush1.msra.mxu0 0.0
    %665 = vmatprep.subr.mxu0 0.0
    %666 = vmatpush1.msra.mxu0 0.0
    %667 = vmatprep.subr.mxu0 0.0
    %668 = vmatpush1.msra.mxu0 0.0
    %669 = vmatprep.subr.mxu0 0.0
    %670 = vmatpush1.msra.mxu0 0.0
    %671 = vmatprep.subr.mxu0 0.0
    %672 = vmatpush1.msra.mxu0 0.0
    %673 = vmatprep.subr.mxu0 0.0
    %674 = vmatpush1.msra.mxu0 0.0
    %675 = vmatprep.subr.mxu0 0.0
    %676 = vmatpush1.msra.mxu0 0.0
    %677 = vmatprep.subr.mxu0 0.0
    %678 = vmatpush1.msra.mxu0 0.0
    %679 = vmatprep.subr.mxu0 0.0
    %680 = vmatpush1.msra.mxu0 0.0
    %681 = vmatprep.subr.mxu0 0.0
    %682 = vmatpush1.msra.mxu0 0.0
    %683 = vmatprep.subr.mxu0 0.0
    %684 = vmatpush1.msra.mxu0 0.0
    %685 = vmatprep.subr.mxu0 0.0
    %686 = vmatpush1.msra.mxu0 0.0
    %687 = vmatprep.subr.mxu0 0.0
    %688 = vmatpush1.msra.mxu0 0.0
    %689 = vmatprep.subr.mxu0 0.0
    %690 = vmatpush1.msra.mxu0 0.0
    %691 = vmatprep.subr.mxu0 0.0
    %692 = vmatpush1.msra.mxu0 0.0
    %693 = vmatprep.subr.mxu0 0.0
    %694 = vmatpush1.msra.mxu0 0.0
    %695 = vmatprep.subr.mxu0 0.0
    %696 = vmatpush1.msra.mxu0 0.0
    %697 = vmatprep.subr.mxu0 0.0
    %698 = vmatpush1.msra.mxu0 0.0
    %699 = vmatprep.subr.mxu0 0.0
    %700 = vmatpush1.msra.mxu0 0.0
    %701 = vmatprep.subr.mxu0 0.0
    %702 = vmatpush1.msra.mxu0 0.0
    %703 = vmatprep.subr.mxu0 0.0
    %704 = vmatpush1.msra.mxu0 0.0
    %705 = vmatprep.subr.mxu0 0.0
    %706 = vmatpush1.msra.mxu0 0.0
    %707 = vmatprep.subr.mxu0 0.0
    %708 = vmatpush1.msra.mxu0 0.0
    %709 = vmatprep.subr.mxu0 0.0
    %710 = vmatpush1.msra.mxu0 0.0
    %711 = vmatprep.subr.mxu0 0.0
    %712 = vmatpush1.msra.mxu0 0.0
    %713 = vmatprep.subr.mxu0 0.0
    %714 = vmatpush1.msra.mxu0 0.0
    %715 = vmatprep.subr.mxu0 0.0
    %716 = vmatpush1.msra.mxu0 0.0
    %717 = vmatprep.subr.mxu0 0.0
    %718 = vmatpush1.msra.mxu0 0.0
    %719 = vmatprep.subr.mxu0 0.0
    %720 = vmatpush1.msra.mxu0 0.0
    %721 = vmatprep.mubr.f32.mxu0 0.0
    %722 = vmatmul.mubr.f32.gmra.mrb[0].mxu0 %v655
    %v723 = vpop.f32.mrb[0].mxu0
    %v724 = vadd.f32 0.0, %v723
    %v725 = vpop.f32.mrb[0].mxu0
    %726 = vdwg.mxu0
    %v727 = vld [vmem:[#allocation10] sm:$0xff]
    %v728 = vld [vmem:[#allocation10 + $0x8] sm:$0xff]
    %v729 = vld [vmem:[#allocation10 + $0x10] sm:$0xff]
    %v730 = vld [vmem:[#allocation10 + $0x18] sm:$0xff]
    %v731 = vld [vmem:[#allocation10 + $0x20] sm:$0xff]
    %v732 = vld [vmem:[#allocation10 + $0x28] sm:$0xff]
    %v733 = vld [vmem:[#allocation10 + $0x30] sm:$0xff]
    %v734 = vld [vmem:[#allocation10 + $0x38] sm:$0xff]
    %v735 = vld [vmem:[#allocation10 + $0x40] sm:$0xff]
    %v736 = vld [vmem:[#allocation10 + $0x48] sm:$0xff]
    %v737 = vld [vmem:[#allocation10 + $0x50] sm:$0xff]
    %v738 = vld [vmem:[#allocation10 + $0x58] sm:$0xff]
    %v739 = vld [vmem:[#allocation10 + $0x60] sm:$0xff]
    %v740 = vld [vmem:[#allocation10 + $0x68] sm:$0xff]
    %v741 = vld [vmem:[#allocation10 + $0x70] sm:$0xff]
    %v742 = vld [vmem:[#allocation10 + $0x78] sm:$0xff]
    %v743 = vld [vmem:[#allocation11] sm:$0x1]
    %v745 = vlaneseq
    %v746 = vshrl.u32 %v745, 7
    %v747 = vsub.s32 0, %v746
    %v748 = vrot.slane %v743, %v747
    %750 = vmatprep.subr.mxu0 0.0
    %751 = vmatpush1.msra.mxu0 %v727
    %752 = vmatprep.subr.mxu0 0.0
    %753 = vmatpush1.msra.mxu0 %v728
    %754 = vmatprep.subr.mxu0 0.0
    %755 = vmatpush1.msra.mxu0 %v729
    %756 = vmatprep.subr.mxu0 0.0
    %757 = vmatpush1.msra.mxu0 %v730
    %758 = vmatprep.subr.mxu0 0.0
    %759 = vmatpush1.msra.mxu0 %v731
    %760 = vmatprep.subr.mxu0 0.0
    %761 = vmatpush1.msra.mxu0 %v732
    %762 = vmatprep.subr.mxu0 0.0
    %763 = vmatpush1.msra.mxu0 %v733
    %764 = vmatprep.subr.mxu0 0.0
    %765 = vmatpush1.msra.mxu0 %v734
    %766 = vmatprep.subr.mxu0 0.0
    %767 = vmatpush1.msra.mxu0 %v735
    %768 = vmatprep.subr.mxu0 0.0
    %769 = vmatpush1.msra.mxu0 %v736
    %770 = vmatprep.subr.mxu0 0.0
    %771 = vmatpush1.msra.mxu0 %v737
    %772 = vmatprep.subr.mxu0 0.0
    %773 = vmatpush1.msra.mxu0 %v738
    %774 = vmatprep.subr.mxu0 0.0
    %775 = vmatpush1.msra.mxu0 %v739
    %776 = vmatprep.subr.mxu0 0.0
    %777 = vmatpush1.msra.mxu0 %v740
    %778 = vmatprep.subr.mxu0 0.0
    %779 = vmatpush1.msra.mxu0 %v741
    %780 = vmatprep.subr.mxu0 0.0
    %781 = vmatpush1.msra.mxu0 %v742
    %782 = vmatprep.subr.mxu0 0.0
    %783 = vmatpush1.msra.mxu0 0.0
    %784 = vmatprep.subr.mxu0 0.0
    %785 = vmatpush1.msra.mxu0 0.0
    %786 = vmatprep.subr.mxu0 0.0
    %787 = vmatpush1.msra.mxu0 0.0
    %788 = vmatprep.subr.mxu0 0.0
    %789 = vmatpush1.msra.mxu0 0.0
    %790 = vmatprep.subr.mxu0 0.0
    %791 = vmatpush1.msra.mxu0 0.0
    %792 = vmatprep.subr.mxu0 0.0
    %793 = vmatpush1.msra.mxu0 0.0
    %794 = vmatprep.subr.mxu0 0.0
    %795 = vmatpush1.msra.mxu0 0.0
    %796 = vmatprep.subr.mxu0 0.0
    %797 = vmatpush1.msra.mxu0 0.0
    %798 = vmatprep.subr.mxu0 0.0
    %799 = vmatpush1.msra.mxu0 0.0
    %800 = vmatprep.subr.mxu0 0.0
    %801 = vmatpush1.msra.mxu0 0.0
    %802 = vmatprep.subr.mxu0 0.0
    %803 = vmatpush1.msra.mxu0 0.0
    %804 = vmatprep.subr.mxu0 0.0
    %805 = vmatpush1.msra.mxu0 0.0
    %806 = vmatprep.subr.mxu0 0.0
    %807 = vmatpush1.msra.mxu0 0.0
    %808 = vmatprep.subr.mxu0 0.0
    %809 = vmatpush1.msra.mxu0 0.0
    %810 = vmatprep.subr.mxu0 0.0
    %811 = vmatpush1.msra.mxu0 0.0
    %812 = vmatprep.subr.mxu0 0.0
    %813 = vmatpush1.msra.mxu0 0.0
    %814 = vmatprep.mubr.f32.mxu0 0.0
    %815 = vmatmul.mubr.f32.gmra.mrb[0].mxu0 %v724
    %v816 = vpop.f32.mrb[0].mxu0
    %v817 = vadd.f32 %v748, %v816
    %v818 = vpop.f32.mrb[0].mxu0
    %819 = vdwg.mxu0
    %v820 = vmax.f32 %v817, 0.0
    %v821 = vld [vmem:[#allocation7] sm:$0xff]
    %v822 = vld [vmem:[#allocation7 + $0x8] sm:$0xff]
    %v823 = vld [vmem:[%s9] sm:$0xff]
    %v824 = vld [vmem:[%s9 + $0x8] sm:$0xff]
    %v826 = vsel %vm571, %v823, 0
    %v829 = vsel %vm571, %v824, 0
    %831 = vmatprep.subr.mxu0 0.0
    %832 = vmatpush1.msra.mxu0 %v645
    %833 = vmatprep.subr.mxu0 0.0
    %834 = vmatpush1.msra.mxu0 %v650
    %835 = vmatprep.subr.mxu0 0.0
    %836 = vmatpush1.msra.mxu0 0.0
    %837 = vmatprep.subr.mxu0 0.0
    %838 = vmatpush1.msra.mxu0 0.0
    %839 = vmatprep.subr.mxu0 0.0
    %840 = vmatpush1.msra.mxu0 0.0
    %841 = vmatprep.subr.mxu0 0.0
    %842 = vmatpush1.msra.mxu0 0.0
    %843 = vmatprep.subr.mxu0 0.0
    %844 = vmatpush1.msra.mxu0 0.0
    %845 = vmatprep.subr.mxu0 0.0
    %846 = vmatpush1.msra.mxu0 0.0
    %847 = vmatprep.subr.mxu0 0.0
    %848 = vmatpush1.msra.mxu0 0.0
    %849 = vmatprep.subr.mxu0 0.0
    %850 = vmatpush1.msra.mxu0 0.0
    %851 = vmatprep.subr.mxu0 0.0
    %852 = vmatpush1.msra.mxu0 0.0
    %853 = vmatprep.subr.mxu0 0.0
    %854 = vmatpush1.msra.mxu0 0.0
    %855 = vmatprep.subr.mxu0 0.0
    %856 = vmatpush1.msra.mxu0 0.0
    %857 = vmatprep.subr.mxu0 0.0
    %858 = vmatpush1.msra.mxu0 0.0
    %859 = vmatprep.subr.mxu0 0.0
    %860 = vmatpush1.msra.mxu0 0.0
    %861 = vmatprep.subr.mxu0 0.0
    %862 = vmatpush1.msra.mxu0 0.0
    %863 = vmatprep.subr.mxu0 0.0
    %864 = vmatpush1.msra.mxu0 0.0
    %865 = vmatprep.subr.mxu0 0.0
    %866 = vmatpush1.msra.mxu0 0.0
    %867 = vmatprep.subr.mxu0 0.0
    %868 = vmatpush1.msra.mxu0 0.0
    %869 = vmatprep.subr.mxu0 0.0
    %870 = vmatpush1.msra.mxu0 0.0
    %871 = vmatprep.subr.mxu0 0.0
    %872 = vmatpush1.msra.mxu0 0.0
    %873 = vmatprep.subr.mxu0 0.0
    %874 = vmatpush1.msra.mxu0 0.0
    %875 = vmatprep.subr.mxu0 0.0
    %876 = vmatpush1.msra.mxu0 0.0
    %877 = vmatprep.subr.mxu0 0.0
    %878 = vmatpush1.msra.mxu0 0.0
    %879 = vmatprep.subr.mxu0 0.0
    %880 = vmatpush1.msra.mxu0 0.0
    %881 = vmatprep.subr.mxu0 0.0
    %882 = vmatpush1.msra.mxu0 0.0
    %883 = vmatprep.subr.mxu0 0.0
    %884 = vmatpush1.msra.mxu0 0.0
    %885 = vmatprep.subr.mxu0 0.0
    %886 = vmatpush1.msra.mxu0 0.0
    %887 = vmatprep.subr.mxu0 0.0
    %888 = vmatpush1.msra.mxu0 0.0
    %889 = vmatprep.subr.mxu0 0.0
    %890 = vmatpush1.msra.mxu0 0.0
    %891 = vmatprep.subr.mxu0 0.0
    %892 = vmatpush1.msra.mxu0 0.0
    %893 = vmatprep.subr.mxu0 0.0
    %894 = vmatpush1.msra.mxu0 0.0
    %895 = vmatprep.mubr.f32.mxu0 0.0
    %896 = vmatmul.mubr.f32.gmra.mrb[0].mxu0 %v826
    %v897 = vpop.f32.mrb[0].mxu0
    %v898 = vadd.f32 0.0, %v897
    %v899 = vpop.f32.mrb[0].mxu0
    %900 = vmatprep.mubr.f32.mxu0 0.0
    %901 = vmatmul.mubr.f32.gmra.mrb[0].mxu0 %v829
    %v902 = vpop.f32.mrb[0].mxu0
    %v903 = vadd.f32 0.0, %v902
    %v904 = vpop.f32.mrb[0].mxu0
    %905 = vdwg.mxu0
    %v907 = vsel %vm571, %v821, 0
    %v910 = vsel %vm571, %v822, 0
    %912 = vmatprep.subr.mxu0 0.0
    %913 = vmatpush1.msra.mxu0 %v472
    %914 = vmatprep.subr.mxu0 0.0
    %915 = vmatpush1.msra.mxu0 %v473
    %916 = vmatprep.subr.mxu0 0.0
    %917 = vmatpush1.msra.mxu0 0.0
    %918 = vmatprep.subr.mxu0 0.0
    %919 = vmatpush1.msra.mxu0 0.0
    %920 = vmatprep.subr.mxu0 0.0
    %921 = vmatpush1.msra.mxu0 0.0
    %922 = vmatprep.subr.mxu0 0.0
    %923 = vmatpush1.msra.mxu0 0.0
    %924 = vmatprep.subr.mxu0 0.0
    %925 = vmatpush1.msra.mxu0 0.0
    %926 = vmatprep.subr.mxu0 0.0
    %927 = vmatpush1.msra.mxu0 0.0
    %928 = vmatprep.subr.mxu0 0.0
    %929 = vmatpush1.msra.mxu0 0.0
    %930 = vmatprep.subr.mxu0 0.0
    %931 = vmatpush1.msra.mxu0 0.0
    %932 = vmatprep.subr.mxu0 0.0
    %933 = vmatpush1.msra.mxu0 0.0
    %934 = vmatprep.subr.mxu0 0.0
    %935 = vmatpush1.msra.mxu0 0.0
    %936 = vmatprep.subr.mxu0 0.0
    %937 = vmatpush1.msra.mxu0 0.0
    %938 = vmatprep.subr.mxu0 0.0
    %939 = vmatpush1.msra.mxu0 0.0
    %940 = vmatprep.subr.mxu0 0.0
    %941 = vmatpush1.msra.mxu0 0.0
    %942 = vmatprep.subr.mxu0 0.0
    %943 = vmatpush1.msra.mxu0 0.0
    %944 = vmatprep.subr.mxu0 0.0
    %945 = vmatpush1.msra.mxu0 0.0
    %946 = vmatprep.subr.mxu0 0.0
    %947 = vmatpush1.msra.mxu0 0.0
    %948 = vmatprep.subr.mxu0 0.0
    %949 = vmatpush1.msra.mxu0 0.0
    %950 = vmatprep.subr.mxu0 0.0
    %951 = vmatpush1.msra.mxu0 0.0
    %952 = vmatprep.subr.mxu0 0.0
    %953 = vmatpush1.msra.mxu0 0.0
    %954 = vmatprep.subr.mxu0 0.0
    %955 = vmatpush1.msra.mxu0 0.0
    %956 = vmatprep.subr.mxu0 0.0
    %957 = vmatpush1.msra.mxu0 0.0
    %958 = vmatprep.subr.mxu0 0.0
    %959 = vmatpush1.msra.mxu0 0.0
    %960 = vmatprep.subr.mxu0 0.0
    %961 = vmatpush1.msra.mxu0 0.0
    %962 = vmatprep.subr.mxu0 0.0
    %963 = vmatpush1.msra.mxu0 0.0
    %964 = vmatprep.subr.mxu0 0.0
    %965 = vmatpush1.msra.mxu0 0.0
    %966 = vmatprep.subr.mxu0 0.0
    %967 = vmatpush1.msra.mxu0 0.0
    %968 = vmatprep.subr.mxu0 0.0
    %969 = vmatpush1.msra.mxu0 0.0
    %970 = vmatprep.subr.mxu0 0.0
    %971 = vmatpush1.msra.mxu0 0.0
    %972 = vmatprep.subr.mxu0 0.0
    %973 = vmatpush1.msra.mxu0 0.0
    %974 = vmatprep.subr.mxu0 0.0
    %975 = vmatpush1.msra.mxu0 0.0
    %976 = vmatprep.mubr.f32.mxu0 0.0
    %977 = vmatmul.mubr.f32.gmra.mrb[0].mxu0 %v907
    %v978 = vpop.f32.mrb[0].mxu0
    %v979 = vadd.f32 %v898, %v978
    %v980 = vpop.f32.mrb[0].mxu0
    %981 = vmatprep.mubr.f32.mxu0 0.0
    %982 = vmatmul.mubr.f32.gmra.mrb[0].mxu0 %v910
    %v983 = vpop.f32.mrb[0].mxu0
    %v984 = vadd.f32 %v903, %v983
    %v985 = vpop.f32.mrb[0].mxu0
    %986 = vdwg.mxu0
    %v987 = vld [vmem:[%s11] sm:$0xff]
    %v988 = vld [vmem:[%s11 + $0x8] sm:$0xff]
    %vm989 = vcmask 64512
    %v991 = vsel %vm989, %v987, 0
    %v994 = vsel %vm989, %v988, 0
    %996 = vmatprep.subr.mxu0 0.0
    %997 = vmatpush1.msra.mxu0 %v820
    %998 = vmatprep.subr.mxu0 0.0
    %999 = vmatpush1.msra.mxu0 0.0
    %1000 = vmatprep.subr.mxu0 0.0
    %1001 = vmatpush1.msra.mxu0 0.0
    %1002 = vmatprep.subr.mxu0 0.0
    %1003 = vmatpush1.msra.mxu0 0.0
    %1004 = vmatprep.subr.mxu0 0.0
    %1005 = vmatpush1.msra.mxu0 0.0
    %1006 = vmatprep.subr.mxu0 0.0
    %1007 = vmatpush1.msra.mxu0 0.0
    %1008 = vmatprep.subr.mxu0 0.0
    %1009 = vmatpush1.msra.mxu0 0.0
    %1010 = vmatprep.subr.mxu0 0.0
    %1011 = vmatpush1.msra.mxu0 0.0
    %1012 = vmatprep.subr.mxu0 0.0
    %1013 = vmatpush1.msra.mxu0 0.0
    %1014 = vmatprep.subr.mxu0 0.0
    %1015 = vmatpush1.msra.mxu0 0.0
    %1016 = vmatprep.subr.mxu0 0.0
    %1017 = vmatpush1.msra.mxu0 0.0
    %1018 = vmatprep.subr.mxu0 0.0
    %1019 = vmatpush1.msra.mxu0 0.0
    %1020 = vmatprep.subr.mxu0 0.0
    %1021 = vmatpush1.msra.mxu0 0.0
    %1022 = vmatprep.subr.mxu0 0.0
    %1023 = vmatpush1.msra.mxu0 0.0
    %1024 = vmatprep.subr.mxu0 0.0
    %1025 = vmatpush1.msra.mxu0 0.0
    %1026 = vmatprep.subr.mxu0 0.0
    %1027 = vmatpush1.msra.mxu0 0.0
    %1028 = vmatprep.subr.mxu0 0.0
    %1029 = vmatpush1.msra.mxu0 0.0
    %1030 = vmatprep.subr.mxu0 0.0
    %1031 = vmatpush1.msra.mxu0 0.0
    %1032 = vmatprep.subr.mxu0 0.0
    %1033 = vmatpush1.msra.mxu0 0.0
    %1034 = vmatprep.subr.mxu0 0.0
    %1035 = vmatpush1.msra.mxu0 0.0
    %1036 = vmatprep.subr.mxu0 0.0
    %1037 = vmatpush1.msra.mxu0 0.0
    %1038 = vmatprep.subr.mxu0 0.0
    %1039 = vmatpush1.msra.mxu0 0.0
    %1040 = vmatprep.subr.mxu0 0.0
    %1041 = vmatpush1.msra.mxu0 0.0
    %1042 = vmatprep.subr.mxu0 0.0
    %1043 = vmatpush1.msra.mxu0 0.0
    %1044 = vmatprep.subr.mxu0 0.0
    %1045 = vmatpush1.msra.mxu0 0.0
    %1046 = vmatprep.subr.mxu0 0.0
    %1047 = vmatpush1.msra.mxu0 0.0
    %1048 = vmatprep.subr.mxu0 0.0
    %1049 = vmatpush1.msra.mxu0 0.0
    %1050 = vmatprep.subr.mxu0 0.0
    %1051 = vmatpush1.msra.mxu0 0.0
    %1052 = vmatprep.subr.mxu0 0.0
    %1053 = vmatpush1.msra.mxu0 0.0
    %1054 = vmatprep.subr.mxu0 0.0
    %1055 = vmatpush1.msra.mxu0 0.0
    %1056 = vmatprep.subr.mxu0 0.0
    %1057 = vmatpush1.msra.mxu0 0.0
    %1058 = vmatprep.subr.mxu0 0.0
    %1059 = vmatpush1.msra.mxu0 0.0
    %1060 = vmatprep.mubr.f32.mxu0 0.0
    %1061 = vmatmul.mubr.f32.gmra.mrb[0].mxu0 %v991
    %v1062 = vpop.f32.mrb[0].mxu0
    %v1063 = vadd.f32 0.0, %v1062
    %v1064 = vpop.f32.mrb[0].mxu0
    %1065 = vmatprep.mubr.f32.mxu0 0.0
    %1066 = vmatmul.mubr.f32.gmra.mrb[0].mxu0 %v994
    %v1067 = vpop.f32.mrb[0].mxu0
    %v1068 = vadd.f32 0.0, %v1067
    %v1069 = vpop.f32.mrb[0].mxu0
    %1070 = vdwg.mxu0
    %v1071 = vadd.f32 %v979, %v1063
    %v1072 = vadd.f32 %v984, %v1068
    %v1073 = vld [vmem:[%s14] sm:$0xff]
    %v1074 = vld [vmem:[%s14 + $0x8] sm:$0xff]
    %v1075 = vld [vmem:[%s14 + $0x10] sm:$0xff]
    %v1076 = vld [vmem:[%s14 + $0x18] sm:$0xff]
    %v1077 = vld [vmem:[%s14 + $0x20] sm:$0xff]
    %v1078 = vld [vmem:[%s14 + $0x28] sm:$0xff]
    %v1079 = vld [vmem:[%s14 + $0x30] sm:$0xff]
    %v1080 = vld [vmem:[%s14 + $0x38] sm:$0xff]
    %v1081 = vld [vmem:[%s14 + $0x40] sm:$0xff]
    %v1082 = vld [vmem:[%s14 + $0x48] sm:$0xff]
    %v1083 = vld [vmem:[%s14 + $0x50] sm:$0xff]
    %v1084 = vld [vmem:[%s14 + $0x58] sm:$0xff]
    %v1085 = vld [vmem:[%s14 + $0x60] sm:$0xff]
    %v1086 = vld [vmem:[%s14 + $0x68] sm:$0xff]
    %v1087 = vld [vmem:[%s14 + $0x70] sm:$0xff]
    %v1088 = vld [vmem:[%s14 + $0x78] sm:$0xff]
    %1089 = vmatprep.subr.mxu0 0.0
    %1090 = vmatpush1.msra.mxu0 %v1073
    %1091 = vmatprep.subr.mxu0 0.0
    %1092 = vmatpush1.msra.mxu0 %v1074
    %1093 = vmatprep.subr.mxu0 0.0
    %1094 = vmatpush1.msra.mxu0 %v1075
    %1095 = vmatprep.subr.mxu0 0.0
    %1096 = vmatpush1.msra.mxu0 %v1076
    %1097 = vmatprep.subr.mxu0 0.0
    %1098 = vmatpush1.msra.mxu0 %v1077
    %1099 = vmatprep.subr.mxu0 0.0
    %1100 = vmatpush1.msra.mxu0 %v1078
    %1101 = vmatprep.subr.mxu0 0.0
    %1102 = vmatpush1.msra.mxu0 %v1079
    %1103 = vmatprep.subr.mxu0 0.0
    %1104 = vmatpush1.msra.mxu0 %v1080
    %1105 = vmatprep.subr.mxu0 0.0
    %1106 = vmatpush1.msra.mxu0 %v1081
    %1107 = vmatprep.subr.mxu0 0.0
    %1108 = vmatpush1.msra.mxu0 %v1082
    %1109 = vmatprep.subr.mxu0 0.0
    %1110 = vmatpush1.msra.mxu0 %v1083
    %1111 = vmatprep.subr.mxu0 0.0
    %1112 = vmatpush1.msra.mxu0 %v1084
    %1113 = vmatprep.subr.mxu0 0.0
    %1114 = vmatpush1.msra.mxu0 %v1085
    %1115 = vmatprep.subr.mxu0 0.0
    %1116 = vmatpush1.msra.mxu0 %v1086
    %1117 = vmatprep.subr.mxu0 0.0
    %1118 = vmatpush1.msra.mxu0 %v1087
    %1119 = vmatprep.subr.mxu0 0.0
    %1120 = vmatpush1.msra.mxu0 %v1088
    %1121 = vmatprep.subr.mxu0 0.0
    %1122 = vmatpush1.msra.mxu0 0.0
    %1123 = vmatprep.subr.mxu0 0.0
    %1124 = vmatpush1.msra.mxu0 0.0
    %1125 = vmatprep.subr.mxu0 0.0
    %1126 = vmatpush1.msra.mxu0 0.0
    %1127 = vmatprep.subr.mxu0 0.0
    %1128 = vmatpush1.msra.mxu0 0.0
    %1129 = vmatprep.subr.mxu0 0.0
    %1130 = vmatpush1.msra.mxu0 0.0
    %1131 = vmatprep.subr.mxu0 0.0
    %1132 = vmatpush1.msra.mxu0 0.0
    %1133 = vmatprep.subr.mxu0 0.0
    %1134 = vmatpush1.msra.mxu0 0.0
    %1135 = vmatprep.subr.mxu0 0.0
    %1136 = vmatpush1.msra.mxu0 0.0
    %1137 = vmatprep.subr.mxu0 0.0
    %1138 = vmatpush1.msra.mxu0 0.0
    %1139 = vmatprep.subr.mxu0 0.0
    %1140 = vmatpush1.msra.mxu0 0.0
    %1141 = vmatprep.subr.mxu0 0.0
    %1142 = vmatpush1.msra.mxu0 0.0
    %1143 = vmatprep.subr.mxu0 0.0
    %1144 = vmatpush1.msra.mxu0 0.0
    %1145 = vmatprep.subr.mxu0 0.0
    %1146 = vmatpush1.msra.mxu0 0.0
    %1147 = vmatprep.subr.mxu0 0.0
    %1148 = vmatpush1.msra.mxu0 0.0
    %1149 = vmatprep.subr.mxu0 0.0
    %1150 = vmatpush1.msra.mxu0 0.0
    %1151 = vmatprep.subr.mxu0 0.0
    %1152 = vmatpush1.msra.mxu0 0.0
    %1153 = vmatprep.mubr.f32.mxu0 0.0
    %1154 = vmatmul.mubr.f32.gmra.mrb[0].mxu0 %v1071
    %v1155 = vpop.f32.mrb[0].mxu0
    %v1156 = vadd.f32 0.0, %v1155
    %v1157 = vpop.f32.mrb[0].mxu0
    %1158 = vmatprep.mubr.f32.mxu0 0.0
    %1159 = vmatmul.mubr.f32.gmra.mrb[0].mxu0 %v1072
    %v1160 = vpop.f32.mrb[0].mxu0
    %v1161 = vadd.f32 0.0, %v1160
    %v1162 = vpop.f32.mrb[0].mxu0
    %1163 = vdwg.mxu0
    %v1164 = vld [vmem:[%s16] sm:$0x1]
    %v1166 = vlaneseq
    %v1167 = vshrl.u32 %v1166, 7
    %v1168 = vsub.s32 0, %v1167
    %v1169 = vrot.slane %v1164, %v1168
    %v1171 = vadd.f32 %v1156, %v1169
    %v1172 = vadd.f32 %v1161, %v1169
    %v1173 = vxor.u32 %v1171, 2147483648
    %v1174 = vxor.u32 %v1172, 2147483648
    %v1175 = vmul.f32 %v1173, 1.442695
    %v1176 = vpow.pop %v1175
    %v1177 = vmul.f32 %v1174, 1.442695
    %v1178 = vpow.pop %v1177
    %v1179 = vadd.f32 %v1176, 1.0
    %v1180 = vadd.f32 %v1178, 1.0
    %v1181 = vrcp.pop %v1179
    %v1182 = vmul.f32 1.0, %v1181
    %v1183 = vrcp.pop %v1180
    %v1184 = vmul.f32 1.0, %v1183
    %v1185 = vld [vmem:[%s17] sm:$0x1]
    %1187 = vset.pattern.permute.xlu0 0
    %1188 = vperm.xlu0 %1187, %v1182
    %v1189 = vpop.permute.xlu0 %1188
    %1192 = vset.pattern.permute.xlu0 0
    %1193 = vperm.xlu0 %1192, %v1184
    %v1194 = vpop.permute.xlu0 %1193
    %v1197 = vlaneseq
    %v1198 = vshrl.u32 %v1197, 7
    %v1199 = vsub.s32 0, %v1198
    %v1200 = vrot.slane %v1185, %v1199
    %v1202 = vmul.f32 %v1189, %v1200
    %v1203 = vmul.f32 %v1194, %v1200
    %v1204 = vld [vmem:[%s18] sm:$0x1]
    %v1206 = vlaneseq
    %v1207 = vshrl.u32 %v1206, 7
    %v1208 = vsub.s32 0, %v1207
    %v1209 = vrot.slane %v1204, %v1208
    %v1211 = vadd.f32 %v1202, %v1209
    %v1212 = vadd.f32 %v1203, %v1209
    %v1213 = vmax.f32 %v1211, %v1212
    %v1214 = vsub.f32 %v1211, %v1213
    %v1215 = vsub.f32 %v1212, %v1213
    %v1216 = vmul.f32 %v1214, 1.442695
    %v1217 = vpow.pop %v1216
    %v1218 = vmul.f32 %v1215, 1.442695
    %v1219 = vpow.pop %v1218
    %v1220 = vadd.f32 %v1217, %v1219
    %v1221 = vrcp.pop %v1220
    %v1222 = vmul.f32 %v1217, %v1221
    %v1223 = vmul.f32 %v1219, %v1221
    %v1224 = vmul.f32 %v1222, %v1071
    %v1225 = vmul.f32 %v1223, %v1072
    %v1226 = vrot.slane %v1224, 4
    %v1227 = vadd.f32 %v1224, %v1226
    %v1228 = vrot.slane %v1227, 2
    %v1229 = vadd.f32 %v1227, %v1228
    %v1230 = vrot.slane %v1229, 1
    %v1231 = vadd.f32 %v1229, %v1230
    %v1232 = vrot.slane %v1225, 4
    %v1233 = vadd.f32 %v1225, %v1232
    %v1234 = vrot.slane %v1233, 2
    %v1235 = vadd.f32 %v1233, %v1234
    %v1236 = vrot.slane %v1235, 1
    %v1237 = vadd.f32 %v1235, %v1236
    %s1238 = scalar_lea.vmem %s16, 1
    %v1239 = vld [vmem:[%s1238] sm:$0x1]
    %v1241 = vlaneseq
    %v1242 = vshrl.u32 %v1241, 7
    %v1243 = vsub.s32 0, %v1242
    %v1244 = vrot.slane %v1239, %v1243
    %1245 = vrot.lane.b32.xlu0 %v1244, 1
    %v1246 = vpop.permute.xlu0 %1245
    %v1248 = vadd.f32 %v1156, %v1246
    %v1249 = vadd.f32 %v1161, %v1246
    %v1250 = vxor.u32 %v1248, 2147483648
    %v1251 = vxor.u32 %v1249, 2147483648
    %v1252 = vmul.f32 %v1250, 1.442695
    %v1253 = vpow.pop %v1252
    %v1254 = vmul.f32 %v1251, 1.442695
    %v1255 = vpow.pop %v1254
    %v1256 = vadd.f32 %v1253, 1.0
    %v1257 = vadd.f32 %v1255, 1.0
    %v1258 = vrcp.pop %v1256
    %v1259 = vmul.f32 1.0, %v1258
    %v1260 = vrcp.pop %v1257
    %v1261 = vmul.f32 1.0, %v1260
    %s1262 = scalar_lea.vmem %s17, 1
    %v1263 = vld [vmem:[%s1262] sm:$0x1]
    %1265 = vset.pattern.permute.xlu0 1
    %1266 = vperm.xlu0 %1265, %v1259
    %v1267 = vpop.permute.xlu0 %1266
    %1270 = vset.pattern.permute.xlu0 1
    %1271 = vperm.xlu0 %1270, %v1261
    %v1272 = vpop.permute.xlu0 %1271
    %v1275 = vlaneseq
    %v1276 = vshrl.u32 %v1275, 7
    %v1277 = vsub.s32 0, %v1276
    %v1278 = vrot.slane %v1263, %v1277
    %v1280 = vmul.f32 %v1267, %v1278
    %v1281 = vmul.f32 %v1272, %v1278
    %s1282 = scalar_lea.vmem %s18, 1
    %v1283 = vld [vmem:[%s1282] sm:$0x1]
    %v1285 = vlaneseq
    %v1286 = vshrl.u32 %v1285, 7
    %v1287 = vsub.s32 0, %v1286
    %v1288 = vrot.slane %v1283, %v1287
    %v1290 = vadd.f32 %v1280, %v1288
    %v1291 = vadd.f32 %v1281, %v1288
    %v1292 = vmax.f32 %v1290, %v1291
    %v1293 = vsub.f32 %v1290, %v1292
    %v1294 = vsub.f32 %v1291, %v1292
    %v1295 = vmul.f32 %v1293, 1.442695
    %v1296 = vpow.pop %v1295
    %v1297 = vmul.f32 %v1294, 1.442695
    %v1298 = vpow.pop %v1297
    %v1299 = vadd.f32 %v1296, %v1298
    %v1300 = vrcp.pop %v1299
    %v1301 = vmul.f32 %v1296, %v1300
    %v1302 = vmul.f32 %v1298, %v1300
    %v1303 = vmul.f32 %v1301, %v1071
    %v1304 = vmul.f32 %v1302, %v1072
    %v1305 = vrot.slane %v1303, 4
    %v1306 = vadd.f32 %v1303, %v1305
    %v1307 = vrot.slane %v1306, 2
    %v1308 = vadd.f32 %v1306, %v1307
    %v1309 = vrot.slane %v1308, 1
    %v1310 = vadd.f32 %v1308, %v1309
    %v1311 = vrot.slane %v1304, 4
    %v1312 = vadd.f32 %v1304, %v1311
    %v1313 = vrot.slane %v1312, 2
    %v1314 = vadd.f32 %v1312, %v1313
    %v1315 = vrot.slane %v1314, 1
    %v1316 = vadd.f32 %v1314, %v1315
    %s1317 = scalar_lea.vmem %s16, 2
    %v1318 = vld [vmem:[%s1317] sm:$0x1]
    %v1320 = vlaneseq
    %v1321 = vshrl.u32 %v1320, 7
    %v1322 = vsub.s32 0, %v1321
    %v1323 = vrot.slane %v1318, %v1322
    %1324 = vrot.lane.b32.xlu0 %v1323, 2
    %v1325 = vpop.permute.xlu0 %1324
    %v1327 = vadd.f32 %v1156, %v1325
    %v1328 = vadd.f32 %v1161, %v1325
    %v1329 = vxor.u32 %v1327, 2147483648
    %v1330 = vxor.u32 %v1328, 2147483648
    %v1331 = vmul.f32 %v1329, 1.442695
    %v1332 = vpow.pop %v1331
    %v1333 = vmul.f32 %v1330, 1.442695
    %v1334 = vpow.pop %v1333
    %v1335 = vadd.f32 %v1332, 1.0
    %v1336 = vadd.f32 %v1334, 1.0
    %v1337 = vrcp.pop %v1335
    %v1338 = vmul.f32 1.0, %v1337
    %v1339 = vrcp.pop %v1336
    %v1340 = vmul.f32 1.0, %v1339
    %s1341 = scalar_lea.vmem %s17, 2
    %v1342 = vld [vmem:[%s1341] sm:$0x1]
    %1344 = vset.pattern.permute.xlu0 2
    %1345 = vperm.xlu0 %1344, %v1338
    %v1346 = vpop.permute.xlu0 %1345
    %1349 = vset.pattern.permute.xlu0 2
    %1350 = vperm.xlu0 %1349, %v1340
    %v1351 = vpop.permute.xlu0 %1350
    %v1354 = vlaneseq
    %v1355 = vshrl.u32 %v1354, 7
    %v1356 = vsub.s32 0, %v1355
    %v1357 = vrot.slane %v1342, %v1356
    %v1359 = vmul.f32 %v1346, %v1357
    %v1360 = vmul.f32 %v1351, %v1357
    %s1361 = scalar_lea.vmem %s18, 2
    %v1362 = vld [vmem:[%s1361] sm:$0x1]
    %v1364 = vlaneseq
    %v1365 = vshrl.u32 %v1364, 7
    %v1366 = vsub.s32 0, %v1365
    %v1367 = vrot.slane %v1362, %v1366
    %v1369 = vadd.f32 %v1359, %v1367
    %v1370 = vadd.f32 %v1360, %v1367
    %v1371 = vmax.f32 %v1369, %v1370
    %v1372 = vsub.f32 %v1369, %v1371
    %v1373 = vsub.f32 %v1370, %v1371
    %v1374 = vmul.f32 %v1372, 1.442695
    %v1375 = vpow.pop %v1374
    %v1376 = vmul.f32 %v1373, 1.442695
    %v1377 = vpow.pop %v1376
    %v1378 = vadd.f32 %v1375, %v1377
    %v1379 = vrcp.pop %v1378
    %v1380 = vmul.f32 %v1375, %v1379
    %v1381 = vmul.f32 %v1377, %v1379
    %v1382 = vmul.f32 %v1380, %v1071
    %v1383 = vmul.f32 %v1381, %v1072
    %v1384 = vrot.slane %v1382, 4
    %v1385 = vadd.f32 %v1382, %v1384
    %v1386 = vrot.slane %v1385, 2
    %v1387 = vadd.f32 %v1385, %v1386
    %v1388 = vrot.slane %v1387, 1
    %v1389 = vadd.f32 %v1387, %v1388
    %v1390 = vrot.slane %v1383, 4
    %v1391 = vadd.f32 %v1383, %v1390
    %v1392 = vrot.slane %v1391, 2
    %v1393 = vadd.f32 %v1391, %v1392
    %v1394 = vrot.slane %v1393, 1
    %v1395 = vadd.f32 %v1393, %v1394
    %s1396 = scalar_lea.vmem %s16, 3
    %v1397 = vld [vmem:[%s1396] sm:$0x1]
    %v1399 = vlaneseq
    %v1400 = vshrl.u32 %v1399, 7
    %v1401 = vsub.s32 0, %v1400
    %v1402 = vrot.slane %v1397, %v1401
    %1403 = vrot.lane.b32.xlu0 %v1402, 3
    %v1404 = vpop.permute.xlu0 %1403
    %v1406 = vadd.f32 %v1156, %v1404
    %v1407 = vadd.f32 %v1161, %v1404
    %v1408 = vxor.u32 %v1406, 2147483648
    %v1409 = vxor.u32 %v1407, 2147483648
    %v1410 = vmul.f32 %v1408, 1.442695
    %v1411 = vpow.pop %v1410
    %v1412 = vmul.f32 %v1409, 1.442695
    %v1413 = vpow.pop %v1412
    %v1414 = vadd.f32 %v1411, 1.0
    %v1415 = vadd.f32 %v1413, 1.0
    %v1416 = vrcp.pop %v1414
    %v1417 = vmul.f32 1.0, %v1416
    %v1418 = vrcp.pop %v1415
    %v1419 = vmul.f32 1.0, %v1418
    %s1420 = scalar_lea.vmem %s17, 3
    %v1421 = vld [vmem:[%s1420] sm:$0x1]
    %1423 = vset.pattern.permute.xlu0 3
    %1424 = vperm.xlu0 %1423, %v1417
    %v1425 = vpop.permute.xlu0 %1424
    %1428 = vset.pattern.permute.xlu0 3
    %1429 = vperm.xlu0 %1428, %v1419
    %v1430 = vpop.permute.xlu0 %1429
    %v1433 = vlaneseq
    %v1434 = vshrl.u32 %v1433, 7
    %v1435 = vsub.s32 0, %v1434
    %v1436 = vrot.slane %v1421, %v1435
    %v1438 = vmul.f32 %v1425, %v1436
    %v1439 = vmul.f32 %v1430, %v1436
    %s1440 = scalar_lea.vmem %s18, 3
    %v1441 = vld [vmem:[%s1440] sm:$0x1]
    %v1443 = vlaneseq
    %v1444 = vshrl.u32 %v1443, 7
    %v1445 = vsub.s32 0, %v1444
    %v1446 = vrot.slane %v1441, %v1445
    %v1448 = vadd.f32 %v1438, %v1446
    %v1449 = vadd.f32 %v1439, %v1446
    %v1450 = vmax.f32 %v1448, %v1449
    %v1451 = vsub.f32 %v1448, %v1450
    %v1452 = vsub.f32 %v1449, %v1450
    %v1453 = vmul.f32 %v1451, 1.442695
    %v1454 = vpow.pop %v1453
    %v1455 = vmul.f32 %v1452, 1.442695
    %v1456 = vpow.pop %v1455
    %v1457 = vadd.f32 %v1454, %v1456
    %v1458 = vrcp.pop %v1457
    %v1459 = vmul.f32 %v1454, %v1458
    %v1460 = vmul.f32 %v1456, %v1458
    %v1461 = vmul.f32 %v1459, %v1071
    %v1462 = vmul.f32 %v1460, %v1072
    %v1463 = vrot.slane %v1461, 4
    %v1464 = vadd.f32 %v1461, %v1463
    %v1465 = vrot.slane %v1464, 2
    %v1466 = vadd.f32 %v1464, %v1465
    %v1467 = vrot.slane %v1466, 1
    %v1468 = vadd.f32 %v1466, %v1467
    %v1469 = vrot.slane %v1462, 4
    %v1470 = vadd.f32 %v1462, %v1469
    %v1471 = vrot.slane %v1470, 2
    %v1472 = vadd.f32 %v1470, %v1471
    %v1473 = vrot.slane %v1472, 1
    %v1474 = vadd.f32 %v1472, %v1473
    %vm1477 = vcmask 1041409
    %v1478 = vsel %vm1477, %v1237, %v1231
    %vm1482 = vcmask 1043459
    %v1483 = vsel %vm1482, %v1316, %v1310
    %vm1487 = vcmask 1045509
    %v1488 = vsel %vm1487, %v1395, %v1389
    %vm1492 = vcmask 1047559
    %v1493 = vsel %vm1492, %v1474, %v1468
    %vm1495 = vcmask 1041408
    %v1496 = vsel %vm1495, %v1478, %v1483
    %vm1497 = vcmask 1043456
    %v1498 = vsel %vm1497, %v1496, %v1488
    %vm1499 = vcmask 1045504
    %v1500 = vsel %vm1499, %v1498, %v1493
    %v1501 = vld [vmem:[%s15] sm:$0xff]
    %v1502 = vld [vmem:[%s15 + $0x8] sm:$0xff]
    %v1503 = vld [vmem:[%s15 + $0x10] sm:$0xff]
    %v1504 = vld [vmem:[%s15 + $0x18] sm:$0xff]
    %v1505 = vld [vmem:[%s15 + $0x20] sm:$0xff]
    %v1506 = vld [vmem:[%s15 + $0x28] sm:$0xff]
    %v1507 = vld [vmem:[%s15 + $0x30] sm:$0xff]
    %v1508 = vld [vmem:[%s15 + $0x38] sm:$0xff]
    %v1509 = vld [vmem:[%s15 + $0x40] sm:$0xff]
    %v1510 = vld [vmem:[%s15 + $0x48] sm:$0xff]
    %v1511 = vld [vmem:[%s15 + $0x50] sm:$0xff]
    %v1512 = vld [vmem:[%s15 + $0x58] sm:$0xff]
    %v1513 = vld [vmem:[%s15 + $0x60] sm:$0xff]
    %v1514 = vld [vmem:[%s15 + $0x68] sm:$0xff]
    %v1515 = vld [vmem:[%s15 + $0x70] sm:$0xff]
    %v1516 = vld [vmem:[%s15 + $0x78] sm:$0xff]
    %1517 = vmatprep.subr.mxu0 0.0
    %1518 = vmatpush1.msra.mxu0 %v1501
    %1519 = vmatprep.subr.mxu0 0.0
    %1520 = vmatpush1.msra.mxu0 %v1502
    %1521 = vmatprep.subr.mxu0 0.0
    %1522 = vmatpush1.msra.mxu0 %v1503
    %1523 = vmatprep.subr.mxu0 0.0
    %1524 = vmatpush1.msra.mxu0 %v1504
    %1525 = vmatprep.subr.mxu0 0.0
    %1526 = vmatpush1.msra.mxu0 %v1505
    %1527 = vmatprep.subr.mxu0 0.0
    %1528 = vmatpush1.msra.mxu0 %v1506
    %1529 = vmatprep.subr.mxu0 0.0
    %1530 = vmatpush1.msra.mxu0 %v1507
    %1531 = vmatprep.subr.mxu0 0.0
    %1532 = vmatpush1.msra.mxu0 %v1508
    %1533 = vmatprep.subr.mxu0 0.0
    %1534 = vmatpush1.msra.mxu0 %v1509
    %1535 = vmatprep.subr.mxu0 0.0
    %1536 = vmatpush1.msra.mxu0 %v1510
    %1537 = vmatprep.subr.mxu0 0.0
    %1538 = vmatpush1.msra.mxu0 %v1511
    %1539 = vmatprep.subr.mxu0 0.0
    %1540 = vmatpush1.msra.mxu0 %v1512
    %1541 = vmatprep.subr.mxu0 0.0
    %1542 = vmatpush1.msra.mxu0 %v1513
    %1543 = vmatprep.subr.mxu0 0.0
    %1544 = vmatpush1.msra.mxu0 %v1514
    %1545 = vmatprep.subr.mxu0 0.0
    %1546 = vmatpush1.msra.mxu0 %v1515
    %1547 = vmatprep.subr.mxu0 0.0
    %1548 = vmatpush1.msra.mxu0 %v1516
    %1549 = vmatprep.subr.mxu0 0.0
    %1550 = vmatpush1.msra.mxu0 0.0
    %1551 = vmatprep.subr.mxu0 0.0
    %1552 = vmatpush1.msra.mxu0 0.0
    %1553 = vmatprep.subr.mxu0 0.0
    %1554 = vmatpush1.msra.mxu0 0.0
    %1555 = vmatprep.subr.mxu0 0.0
    %1556 = vmatpush1.msra.mxu0 0.0
    %1557 = vmatprep.subr.mxu0 0.0
    %1558 = vmatpush1.msra.mxu0 0.0
    %1559 = vmatprep.subr.mxu0 0.0
    %1560 = vmatpush1.msra.mxu0 0.0
    %1561 = vmatprep.subr.mxu0 0.0
    %1562 = vmatpush1.msra.mxu0 0.0
    %1563 = vmatprep.subr.mxu0 0.0
    %1564 = vmatpush1.msra.mxu0 0.0
    %1565 = vmatprep.subr.mxu0 0.0
    %1566 = vmatpush1.msra.mxu0 0.0
    %1567 = vmatprep.subr.mxu0 0.0
    %1568 = vmatpush1.msra.mxu0 0.0
    %1569 = vmatprep.subr.mxu0 0.0
    %1570 = vmatpush1.msra.mxu0 0.0
    %1571 = vmatprep.subr.mxu0 0.0
    %1572 = vmatpush1.msra.mxu0 0.0
    %1573 = vmatprep.subr.mxu0 0.0
    %1574 = vmatpush1.msra.mxu0 0.0
    %1575 = vmatprep.subr.mxu0 0.0
    %1576 = vmatpush1.msra.mxu0 0.0
    %1577 = vmatprep.subr.mxu0 0.0
    %1578 = vmatpush1.msra.mxu0 0.0
    %1579 = vmatprep.subr.mxu0 0.0
    %1580 = vmatpush1.msra.mxu0 0.0
    %1581 = vmatprep.mubr.f32.mxu0 0.0
    %1582 = vmatmul.mubr.f32.gmra.mrb[0].mxu0 %v1500
    %v1583 = vpop.f32.mrb[0].mxu0
    %v1584 = vadd.f32 0.0, %v1583
    %v1585 = vpop.f32.mrb[0].mxu0
    %1586 = vdwg.mxu0
    %v1589 = vunpack.c.l.s4 1966171168
    %v1590 = vunpack.c.0.s8 %v1589
    %v1591 = vlaneseq
    %v1592 = vshrl.u32 %v1591, 7
    %v1593 = vsub.s32 %v1590, %v1592
    %v1594 = vrot.slane %v1584, %v1593
    %v1595 = vcombine.high %v1594, %v1594
    %v1597 = vunpack.c.l.s4 1966171168
    %v1598 = vunpack.c.0.s8 %v1597
    %v1599 = vlaneseq
    %v1600 = vshrl.u32 %v1599, 7
    %v1601 = vsub.s32 %v1598, %v1600
    %v1602 = vrot.slane %v1594, %v1601
    %v1604 = vunpack.c.l.s4 1966171168
    %v1605 = vunpack.c.0.s8 %v1604
    %v1606 = vlaneseq
    %v1607 = vshrl.u32 %v1606, 7
    %v1608 = vsub.s32 %v1605, %v1607
    %v1609 = vrot.slane %v1595, %v1608
    %v1610 = vlaneseq
    %v1611 = vshrl.u32 %v1610, 7
    %v1612 = vsub.s32 0, %v1611
    %v1613 = vrot.slane %v1602, %v1612
    %v1614 = vlaneseq
    %v1615 = vshrl.u32 %v1614, 7
    %v1616 = vsub.s32 0, %v1615
    %v1617 = vrot.slane %v1609, %v1616
    %1618 = vrot.lane.b32.xlu0 %v1613, 4
    %v1619 = vpop.permute.xlu0 %1618
    %1620 = vrot.lane.b32.xlu0 %v1617, 4
    %v1621 = vpop.permute.xlu0 %1620
    %v1624 = vadd.f32 %v1156, %v1619
    %v1625 = vadd.f32 %v1161, %v1621
    %v1626 = vld [vmem:[%s19] sm:$0x1]
    %v1628 = vlaneseq
    %v1629 = vshrl.u32 %v1628, 7
    %v1630 = vsub.s32 0, %v1629
    %v1631 = vrot.slane %v1626, %v1630
    %1632 = vrot.lane.b32.xlu0 %v1631, 4
    %v1633 = vpop.permute.xlu0 %1632
    %v1635 = vadd.f32 %v1624, %v1633
    %v1636 = vadd.f32 %v1625, %v1633
    %v1637 = vxor.u32 %v1635, 2147483648
    %v1638 = vxor.u32 %v1636, 2147483648
    %v1639 = vmul.f32 %v1637, 1.442695
    %v1640 = vpow.pop %v1639
    %v1641 = vmul.f32 %v1638, 1.442695
    %v1642 = vpow.pop %v1641
    %v1643 = vadd.f32 %v1640, 1.0
    %v1644 = vadd.f32 %v1642, 1.0
    %v1645 = vrcp.pop %v1643
    %v1646 = vmul.f32 1.0, %v1645
    %v1647 = vrcp.pop %v1644
    %v1648 = vmul.f32 1.0, %v1647
    %v1649 = vld [vmem:[%s20] sm:$0x1]
    %1651 = vset.pattern.permute.xlu0 4
    %1652 = vperm.xlu0 %1651, %v1646
    %v1653 = vpop.permute.xlu0 %1652
    %1656 = vset.pattern.permute.xlu0 4
    %1657 = vperm.xlu0 %1656, %v1648
    %v1658 = vpop.permute.xlu0 %1657
    %v1661 = vlaneseq
    %v1662 = vshrl.u32 %v1661, 7
    %v1663 = vsub.s32 0, %v1662
    %v1664 = vrot.slane %v1649, %v1663
    %v1666 = vmul.f32 %v1653, %v1664
    %v1667 = vmul.f32 %v1658, %v1664
    %v1668 = vld [vmem:[%s21] sm:$0x1]
    %v1670 = vlaneseq
    %v1671 = vshrl.u32 %v1670, 7
    %v1672 = vsub.s32 0, %v1671
    %v1673 = vrot.slane %v1668, %v1672
    %v1675 = vadd.f32 %v1666, %v1673
    %v1676 = vadd.f32 %v1667, %v1673
    %v1677 = vadd.f32 %v1675, %v1222
    %v1678 = vadd.f32 %v1676, %v1223
    %v1679 = vmax.f32 %v1677, %v1678
    %v1680 = vsub.f32 %v1677, %v1679
    %v1681 = vsub.f32 %v1678, %v1679
    %v1682 = vmul.f32 %v1680, 1.442695
    %v1683 = vpow.pop %v1682
    %v1684 = vmul.f32 %v1681, 1.442695
    %v1685 = vpow.pop %v1684
    %v1686 = vadd.f32 %v1683, %v1685
    %v1687 = vrcp.pop %v1686
    %v1688 = vmul.f32 %v1683, %v1687
    %v1689 = vmul.f32 %v1685, %v1687
    %v1690 = vmul.f32 %v1688, %v1071
    %v1691 = vmul.f32 %v1689, %v1072
    %v1692 = vrot.slane %v1690, 4
    %v1693 = vadd.f32 %v1690, %v1692
    %v1694 = vrot.slane %v1693, 2
    %v1695 = vadd.f32 %v1693, %v1694
    %v1696 = vrot.slane %v1695, 1
    %v1697 = vadd.f32 %v1695, %v1696
    %v1698 = vrot.slane %v1691, 4
    %v1699 = vadd.f32 %v1691, %v1698
    %v1700 = vrot.slane %v1699, 2
    %v1701 = vadd.f32 %v1699, %v1700
    %v1702 = vrot.slane %v1701, 1
    %v1703 = vadd.f32 %v1701, %v1702
    %v1704 = vcombine.high %v1602, %v1602
    %v1705 = vcombine.high %v1609, %v1609
    %v1706 = vlaneseq
    %v1707 = vshrl.u32 %v1706, 7
    %v1708 = vsub.s32 0, %v1707
    %v1709 = vrot.slane %v1704, %v1708
    %v1710 = vlaneseq
    %v1711 = vshrl.u32 %v1710, 7
    %v1712 = vsub.s32 0, %v1711
    %v1713 = vrot.slane %v1705, %v1712
    %1714 = vrot.lane.b32.xlu0 %v1709, 4
    %v1715 = vpop.permute.xlu0 %1714
    %1716 = vrot.lane.b32.xlu0 %v1713, 4
    %v1717 = vpop.permute.xlu0 %1716
    %v1720 = vadd.f32 %v1156, %v1715
    %v1721 = vadd.f32 %v1161, %v1717
    %s1722 = scalar_lea.vmem %s19, 1
    %v1723 = vld [vmem:[%s1722] sm:$0x1]
    %v1725 = vlaneseq
    %v1726 = vshrl.u32 %v1725, 7
    %v1727 = vsub.s32 0, %v1726
    %v1728 = vrot.slane %v1723, %v1727
    %1729 = vrot.lane.b32.xlu0 %v1728, 5
    %v1730 = vpop.permute.xlu0 %1729
    %v1732 = vadd.f32 %v1720, %v1730
    %v1733 = vadd.f32 %v1721, %v1730
    %v1734 = vxor.u32 %v1732, 2147483648
    %v1735 = vxor.u32 %v1733, 2147483648
    %v1736 = vmul.f32 %v1734, 1.442695
    %v1737 = vpow.pop %v1736
    %v1738 = vmul.f32 %v1735, 1.442695
    %v1739 = vpow.pop %v1738
    %v1740 = vadd.f32 %v1737, 1.0
    %v1741 = vadd.f32 %v1739, 1.0
    %v1742 = vrcp.pop %v1740
    %v1743 = vmul.f32 1.0, %v1742
    %v1744 = vrcp.pop %v1741
    %v1745 = vmul.f32 1.0, %v1744
    %s1746 = scalar_lea.vmem %s20, 1
    %v1747 = vld [vmem:[%s1746] sm:$0x1]
    %1749 = vset.pattern.permute.xlu0 5
    %1750 = vperm.xlu0 %1749, %v1743
    %v1751 = vpop.permute.xlu0 %1750
    %1754 = vset.pattern.permute.xlu0 5
    %1755 = vperm.xlu0 %1754, %v1745
    %v1756 = vpop.permute.xlu0 %1755
    %v1759 = vlaneseq
    %v1760 = vshrl.u32 %v1759, 7
    %v1761 = vsub.s32 0, %v1760
    %v1762 = vrot.slane %v1747, %v1761
    %v1764 = vmul.f32 %v1751, %v1762
    %v1765 = vmul.f32 %v1756, %v1762
    %s1766 = scalar_lea.vmem %s21, 1
    %v1767 = vld [vmem:[%s1766] sm:$0x1]
    %v1769 = vlaneseq
    %v1770 = vshrl.u32 %v1769, 7
    %v1771 = vsub.s32 0, %v1770
    %v1772 = vrot.slane %v1767, %v1771
    %v1774 = vadd.f32 %v1764, %v1772
    %v1775 = vadd.f32 %v1765, %v1772
    %v1776 = vadd.f32 %v1774, %v1301
    %v1777 = vadd.f32 %v1775, %v1302
    %v1778 = vmax.f32 %v1776, %v1777
    %v1779 = vsub.f32 %v1776, %v1778
    %v1780 = vsub.f32 %v1777, %v1778
    %v1781 = vmul.f32 %v1779, 1.442695
    %v1782 = vpow.pop %v1781
    %v1783 = vmul.f32 %v1780, 1.442695
    %v1784 = vpow.pop %v1783
    %v1785 = vadd.f32 %v1782, %v1784
    %v1786 = vrcp.pop %v1785
    %v1787 = vmul.f32 %v1782, %v1786
    %v1788 = vmul.f32 %v1784, %v1786
    %v1789 = vmul.f32 %v1787, %v1071
    %v1790 = vmul.f32 %v1788, %v1072
    %v1791 = vrot.slane %v1789, 4
    %v1792 = vadd.f32 %v1789, %v1791
    %v1793 = vrot.slane %v1792, 2
    %v1794 = vadd.f32 %v1792, %v1793
    %v1795 = vrot.slane %v1794, 1
    %v1796 = vadd.f32 %v1794, %v1795
    %v1797 = vrot.slane %v1790, 4
    %v1798 = vadd.f32 %v1790, %v1797
    %v1799 = vrot.slane %v1798, 2
    %v1800 = vadd.f32 %v1798, %v1799
    %v1801 = vrot.slane %v1800, 1
    %v1802 = vadd.f32 %v1800, %v1801
    %v1803 = vcombine.high %v1584, %v1584
    %v1805 = vunpack.c.l.s4 1966171168
    %v1806 = vunpack.c.0.s8 %v1805
    %v1807 = vlaneseq
    %v1808 = vshrl.u32 %v1807, 7
    %v1809 = vsub.s32 %v1806, %v1808
    %v1810 = vrot.slane %v1803, %v1809
    %v1811 = vcombine.high %v1810, %v1810
    %v1813 = vunpack.c.l.s4 1966171168
    %v1814 = vunpack.c.0.s8 %v1813
    %v1815 = vlaneseq
    %v1816 = vshrl.u32 %v1815, 7
    %v1817 = vsub.s32 %v1814, %v1816
    %v1818 = vrot.slane %v1810, %v1817
    %v1820 = vunpack.c.l.s4 1966171168
    %v1821 = vunpack.c.0.s8 %v1820
    %v1822 = vlaneseq
    %v1823 = vshrl.u32 %v1822, 7
    %v1824 = vsub.s32 %v1821, %v1823
    %v1825 = vrot.slane %v1811, %v1824
    %v1826 = vlaneseq
    %v1827 = vshrl.u32 %v1826, 7
    %v1828 = vsub.s32 0, %v1827
    %v1829 = vrot.slane %v1818, %v1828
    %v1830 = vlaneseq
    %v1831 = vshrl.u32 %v1830, 7
    %v1832 = vsub.s32 0, %v1831
    %v1833 = vrot.slane %v1825, %v1832
    %1834 = vrot.lane.b32.xlu0 %v1829, 4
    %v1835 = vpop.permute.xlu0 %1834
    %1836 = vrot.lane.b32.xlu0 %v1833, 4
    %v1837 = vpop.permute.xlu0 %1836
    %v1840 = vadd.f32 %v1156, %v1835
    %v1841 = vadd.f32 %v1161, %v1837
    %s1842 = scalar_lea.vmem %s19, 2
    %v1843 = vld [vmem:[%s1842] sm:$0x1]
    %v1845 = vlaneseq
    %v1846 = vshrl.u32 %v1845, 7
    %v1847 = vsub.s32 0, %v1846
    %v1848 = vrot.slane %v1843, %v1847
    %1849 = vrot.lane.b32.xlu0 %v1848, 6
    %v1850 = vpop.permute.xlu0 %1849
    %v1852 = vadd.f32 %v1840, %v1850
    %v1853 = vadd.f32 %v1841, %v1850
    %v1854 = vxor.u32 %v1852, 2147483648
    %v1855 = vxor.u32 %v1853, 2147483648
    %v1856 = vmul.f32 %v1854, 1.442695
    %v1857 = vpow.pop %v1856
    %v1858 = vmul.f32 %v1855, 1.442695
    %v1859 = vpow.pop %v1858
    %v1860 = vadd.f32 %v1857, 1.0
    %v1861 = vadd.f32 %v1859, 1.0
    %v1862 = vrcp.pop %v1860
    %v1863 = vmul.f32 1.0, %v1862
    %v1864 = vrcp.pop %v1861
    %v1865 = vmul.f32 1.0, %v1864
    %s1866 = scalar_lea.vmem %s20, 2
    %v1867 = vld [vmem:[%s1866] sm:$0x1]
    %1869 = vset.pattern.permute.xlu0 6
    %1870 = vperm.xlu0 %1869, %v1863
    %v1871 = vpop.permute.xlu0 %1870
    %1874 = vset.pattern.permute.xlu0 6
    %1875 = vperm.xlu0 %1874, %v1865
    %v1876 = vpop.permute.xlu0 %1875
    %v1879 = vlaneseq
    %v1880 = vshrl.u32 %v1879, 7
    %v1881 = vsub.s32 0, %v1880
    %v1882 = vrot.slane %v1867, %v1881
    %v1884 = vmul.f32 %v1871, %v1882
    %v1885 = vmul.f32 %v1876, %v1882
    %s1886 = scalar_lea.vmem %s21, 2
    %v1887 = vld [vmem:[%s1886] sm:$0x1]
    %v1889 = vlaneseq
    %v1890 = vshrl.u32 %v1889, 7
    %v1891 = vsub.s32 0, %v1890
    %v1892 = vrot.slane %v1887, %v1891
    %v1894 = vadd.f32 %v1884, %v1892
    %v1895 = vadd.f32 %v1885, %v1892
    %v1896 = vadd.f32 %v1894, %v1380
    %v1897 = vadd.f32 %v1895, %v1381
    %v1898 = vmax.f32 %v1896, %v1897
    %v1899 = vsub.f32 %v1896, %v1898
    %v1900 = vsub.f32 %v1897, %v1898
    %v1901 = vmul.f32 %v1899, 1.442695
    %v1902 = vpow.pop %v1901
    %v1903 = vmul.f32 %v1900, 1.442695
    %v1904 = vpow.pop %v1903
    %v1905 = vadd.f32 %v1902, %v1904
    %v1906 = vrcp.pop %v1905
    %v1907 = vmul.f32 %v1902, %v1906
    %v1908 = vmul.f32 %v1904, %v1906
    %v1909 = vmul.f32 %v1907, %v1071
    %v1910 = vmul.f32 %v1908, %v1072
    %v1911 = vrot.slane %v1909, 4
    %v1912 = vadd.f32 %v1909, %v1911
    %v1913 = vrot.slane %v1912, 2
    %v1914 = vadd.f32 %v1912, %v1913
    %v1915 = vrot.slane %v1914, 1
    %v1916 = vadd.f32 %v1914, %v1915
    %v1917 = vrot.slane %v1910, 4
    %v1918 = vadd.f32 %v1910, %v1917
    %v1919 = vrot.slane %v1918, 2
    %v1920 = vadd.f32 %v1918, %v1919
    %v1921 = vrot.slane %v1920, 1
    %v1922 = vadd.f32 %v1920, %v1921
    %v1923 = vcombine.high %v1818, %v1818
    %v1924 = vcombine.high %v1825, %v1825
    %v1925 = vlaneseq
    %v1926 = vshrl.u32 %v1925, 7
    %v1927 = vsub.s32 0, %v1926
    %v1928 = vrot.slane %v1923, %v1927
    %v1929 = vlaneseq
    %v1930 = vshrl.u32 %v1929, 7
    %v1931 = vsub.s32 0, %v1930
    %v1932 = vrot.slane %v1924, %v1931
    %1933 = vrot.lane.b32.xlu0 %v1928, 4
    %v1934 = vpop.permute.xlu0 %1933
    %1935 = vrot.lane.b32.xlu0 %v1932, 4
    %v1936 = vpop.permute.xlu0 %1935
    %v1939 = vadd.f32 %v1156, %v1934
    %v1940 = vadd.f32 %v1161, %v1936
    %s1941 = scalar_lea.vmem %s19, 3
    %v1942 = vld [vmem:[%s1941] sm:$0x1]
    %v1944 = vlaneseq
    %v1945 = vshrl.u32 %v1944, 7
    %v1946 = vsub.s32 0, %v1945
    %v1947 = vrot.slane %v1942, %v1946
    %1948 = vrot.lane.b32.xlu0 %v1947, 7
    %v1949 = vpop.permute.xlu0 %1948
    %v1951 = vadd.f32 %v1939, %v1949
    %v1952 = vadd.f32 %v1940, %v1949
    %v1953 = vxor.u32 %v1951, 2147483648
    %v1954 = vxor.u32 %v1952, 2147483648
    %v1955 = vmul.f32 %v1953, 1.442695
    %v1956 = vpow.pop %v1955
    %v1957 = vmul.f32 %v1954, 1.442695
    %v1958 = vpow.pop %v1957
    %v1959 = vadd.f32 %v1956, 1.0
    %v1960 = vadd.f32 %v1958, 1.0
    %v1961 = vrcp.pop %v1959
    %v1962 = vmul.f32 1.0, %v1961
    %v1963 = vrcp.pop %v1960
    %v1964 = vmul.f32 1.0, %v1963
    %s1965 = scalar_lea.vmem %s20, 3
    %v1966 = vld [vmem:[%s1965] sm:$0x1]
    %1968 = vset.pattern.permute.xlu0 7
    %1969 = vperm.xlu0 %1968, %v1962
    %v1970 = vpop.permute.xlu0 %1969
    %1973 = vset.pattern.permute.xlu0 7
    %1974 = vperm.xlu0 %1973, %v1964
    %v1975 = vpop.permute.xlu0 %1974
    %v1978 = vlaneseq
    %v1979 = vshrl.u32 %v1978, 7
    %v1980 = vsub.s32 0, %v1979
    %v1981 = vrot.slane %v1966, %v1980
    %v1983 = vmul.f32 %v1970, %v1981
    %v1984 = vmul.f32 %v1975, %v1981
    %s1985 = scalar_lea.vmem %s21, 3
    %v1986 = vld [vmem:[%s1985] sm:$0x1]
    %v1988 = vlaneseq
    %v1989 = vshrl.u32 %v1988, 7
    %v1990 = vsub.s32 0, %v1989
    %v1991 = vrot.slane %v1986, %v1990
    %v1993 = vadd.f32 %v1983, %v1991
    %v1994 = vadd.f32 %v1984, %v1991
    %v1995 = vadd.f32 %v1993, %v1459
    %v1996 = vadd.f32 %v1994, %v1460
    %v1997 = vmax.f32 %v1995, %v1996
    %v1998 = vsub.f32 %v1995, %v1997
    %v1999 = vsub.f32 %v1996, %v1997
    %v2000 = vmul.f32 %v1998, 1.442695
    %v2001 = vpow.pop %v2000
    %v2002 = vmul.f32 %v1999, 1.442695
    %v2003 = vpow.pop %v2002
    %v2004 = vadd.f32 %v2001, %v2003
    %v2005 = vrcp.pop %v2004
    %v2006 = vmul.f32 %v2001, %v2005
    %v2007 = vmul.f32 %v2003, %v2005
    %v2008 = vmul.f32 %v2006, %v1071
    %v2009 = vmul.f32 %v2007, %v1072
    %v2010 = vrot.slane %v2008, 4
    %v2011 = vadd.f32 %v2008, %v2010
    %v2012 = vrot.slane %v2011, 2
    %v2013 = vadd.f32 %v2011, %v2012
    %v2014 = vrot.slane %v2013, 1
    %v2015 = vadd.f32 %v2013, %v2014
    %v2016 = vrot.slane %v2009, 4
    %v2017 = vadd.f32 %v2009, %v2016
    %v2018 = vrot.slane %v2017, 2
    %v2019 = vadd.f32 %v2017, %v2018
    %v2020 = vrot.slane %v2019, 1
    %v2021 = vadd.f32 %v2019, %v2020
    %v2024 = vsel %vm1477, %v1703, %v1697
    %v2028 = vsel %vm1482, %v1802, %v1796
    %v2032 = vsel %vm1487, %v1922, %v1916
    %v2036 = vsel %vm1492, %v2021, %v2015
    %v2038 = vsel %vm1495, %v2024, %v2028
    %v2039 = vsel %vm1497, %v2038, %v2032
    %v2040 = vsel %vm1499, %v2039, %v2036
    %2041 = vst [vmem:[#allocation13] sm:$0xff] %v2040
    // Predicated region
    $region114: #{_lambda_.1} parent=1 // pred_check
      _
    $region115: #{_lambda_.1} parent=1 // pred_check_branch
      %2043 = sbr.rel (0) target = $region117
    $region116: #{_lambda_.1} parent=1 // pred_region
      %s2045 = ssub.s32 128, 128
      %2046 = vsyncadd [#allocation4], %s2045
      %s2048 = sshll.u32 [#allocation13], 4
      %s2049 = int_to_ptr.vmem [resolvable:$true] %s2048
      %2051 = dma.vmem_to_hbm [thread:$0]  %s2049, 128, %s22, [#allocation4]
    $region117: #{_lambda_.1} parent=1 // pred_fallthru
      _
    // Predicated region
    $region118: #{_lambda_.1} parent=1 // pred_check
      _
    $region119: #{_lambda_.1} parent=1 // pred_check_branch
      %2053 = sbr.rel (0) target = $region121
    $region120: #{_lambda_.1} parent=1 // pred_region
      %2054 = dma.done [#allocation4], 128
    $region121: #{_lambda_.1} parent=1 // pred_fallthru
      _
    %2055 = vsyncpa [#allocation3], 1
    %2056 = vsyncpa [#allocation6], 1
    %2057 = vsyncpa [#allocation9], 1
    %2058 = vsyncpa [#allocation12], 1
    %2059 = vsyncpa [#allocation4], 1

</llo_original>
